<compile_context>
chip_gen: v7x
topology: tpu7x:2x2x1
jax: 0.10.0
libtpu: 0.0.40
codegen_flags: <defaults>
</compile_context>

<pallas_src>
from functools import partial

import jax
import jax.numpy as jnp
from jax.experimental import pallas as pl
from jax.experimental.pallas import tpu as pltpu

A_DIM = 6
S0, S1 = 6, 8            # state_dim = [6, 8]  (so that 2048 features match linear3)
ACT_DIM = 6
C_OUT = 128              # conv1 output channels
K = 4                    # conv1 kernel width
L_FULL = S1 - K + 1      # 5 conv output positions (rows 2, 3)
L_SHORT = A_DIM - K + 1  # 3 conv output positions (row 4)
HIDDEN = 256
XF = S0 * S1                                          # 48 flattened inputs
NF = 2 * C_OUT + (2 * L_FULL + L_SHORT) * C_OUT       # 1920 relu'd features


def _round_up(n, m):
    return ((n + m - 1) // m) * m


def _pick_feat_chunk(tb):
    # NF blocking for the feature stage.  Each chunk's f32 result is consumed
    # by an elementwise epilogue + store (streams off the MXU result FIFO), so
    # the chunk only needs to be small enough to bound scheduling/register
    # pressure.  384 (5 chunks of 1920) keeps the MXU N-width >= 256 per
    # staging; tiny batch tiles skip chunking entirely.
    if tb <= 128:
        return NF
    return 384


# ---------------------------------------------------------------------------
# Kernel: chunked feature stage (dot1 -> bias -> relu -> bf16 store), then one
# K=1920 dot (linear3), one K=256 dot (linear4), and the softmax.
# ---------------------------------------------------------------------------
def actor_kernel(x_ref, m_ref, bfeat_ref, w3_ref, b3_ref, w2e_ref, w4_ref,
                 b4_ref, out_ref, feat_ref, *, tk, approx_recip):
    x = x_ref[...]                                   # [TB, 48] bf16 (fast) / f32

    # Feature stage, blocked along NF: the f32 chunk never round-trips VMEM,
    # only the (bf16) activations are written to the feat scratch.
    for c in range(NF // tk):
        lo = c * tk
        pre = (jnp.dot(x, m_ref[:, lo:lo + tk],
                       preferred_element_type=jnp.float32)
               + bfeat_ref[:, lo:lo + tk])
        feat_ref[:, lo:lo + tk] = jnp.maximum(pre, 0.0).astype(feat_ref.dtype)

    # linear3 over permuted W3: ONE K=1920 dot, K-accumulation stays inside the
    # MXU result buffer.  split5 (no ReLU) is folded to an exact rank-1 update.
    s5 = x[:, XF - 1:XF].astype(jnp.float32)         # x[:, 5, -1]
    acc = (jnp.dot(feat_ref[...], w3_ref[...],
                   preferred_element_type=jnp.float32)
           + b3_ref[...] + s5 * w2e_ref[...])
    h = jnp.maximum(acc, 0.0).astype(w4_ref.dtype)   # relu + cast in one epilogue

    logits = jnp.dot(h, w4_ref[...],
                     preferred_element_type=jnp.float32) + b4_ref[...]

    # softmax over actions (dim=1), all in f32; divide moved to the EUP slot.
    m = jnp.max(logits, axis=1, keepdims=True)
    e = jnp.exp(logits - m)
    denom = jnp.sum(e, axis=1, keepdims=True)
    out_ref[...] = e * pl.reciprocal(denom, approx=approx_recip)


# ---------------------------------------------------------------------------
# Parameter construction (torch-style layouts, deterministic uniform init).
# ---------------------------------------------------------------------------
def make_params(key):
    ks = jax.random.split(key, 12)

    def unif(k, shape, fan_in):
        b = 1.0 / (fan_in ** 0.5)
        return jax.random.uniform(k, shape, jnp.float32, -b, b)

    return dict(
        w0=unif(ks[0], (128, 1), 1),        b0=unif(ks[1], (128,), 1),
        w1=unif(ks[2], (128, 1), 1),        b1=unif(ks[3], (128,), 1),
        w2=unif(ks[4], (128, 1), 1),        b2=unif(ks[5], (128,), 1),
        wc=unif(ks[6], (128, 1, 4), 4),     bc=unif(ks[7], (128,), 4),
        w3=unif(ks[8], (256, 2048), 2048),  b3=unif(ks[9], (256,), 2048),
        w4=unif(ks[10], (6, 256), 256),     b4=unif(ks[11], (6,), 256),
    )


def prep_kernel_params(p, use_bf16=True):
    f32 = jnp.float32
    w0 = p["w0"][:, 0]                      # [128]
    w1 = p["w1"][:, 0]
    w2 = p["w2"][:, 0]
    wc_k = p["wc"][:, 0, :].T               # [4, 128]  (tap, out_channel)
    bc = p["bc"]                            # [128]

    # Toeplitz matrices: conv_pre[b, t*128 + c] = sum_j x[b, j] * T[j, t*128+c]
    def toeplitz(n_pos):
        t_mat = jnp.zeros((S1, n_pos * C_OUT), f32)
        for t in range(n_pos):
            t_mat = t_mat.at[t:t + K, t * C_OUT:(t + 1) * C_OUT].set(wc_k)
        return t_mat

    T_full = toeplitz(L_FULL)               # [8, 640]
    T_short = toeplitz(L_SHORT)             # [8, 384] (rows 6,7 are zero)

    # Big feature matrix M: x_flat [B,48] @ M [48,1920] -> all pre-ReLU features
    M = jnp.zeros((XF, NF), f32)
    M = M.at[S1 - 1, 0:C_OUT].set(w0)                       # x[:,0,-1] -> split0
    M = M.at[2 * S1 - 1, C_OUT:2 * C_OUT].set(w1)           # x[:,1,-1] -> split1
    off = 2 * C_OUT
    M = M.at[2 * S1:3 * S1, off:off + L_FULL * C_OUT].set(T_full)
    off += L_FULL * C_OUT
    M = M.at[3 * S1:4 * S1, off:off + L_FULL * C_OUT].set(T_full)
    off += L_FULL * C_OUT
    M = M.at[4 * S1:5 * S1, off:off + L_SHORT * C_OUT].set(T_short)
    off += L_SHORT * C_OUT
    assert off == NF

    bfeat = jnp.concatenate(
        [p["b0"], p["b1"], jnp.tile(bc, L_FULL), jnp.tile(bc, L_FULL),
         jnp.tile(bc, L_SHORT)]).reshape(1, NF)

    # linear3 weight: transpose + permute conv rows from torch c-major (c*T+t)
    # to the kernel's t-major (t*128+c) flatten order.
    W3T = p["w3"].T                          # [2048, 256]
    seg0 = W3T[0:128]
    seg1 = W3T[128:256]
    seg2 = W3T[256:896].reshape(C_OUT, L_FULL, HIDDEN).transpose(1, 0, 2).reshape(-1, HIDDEN)
    seg3 = W3T[896:1536].reshape(C_OUT, L_FULL, HIDDEN).transpose(1, 0, 2).reshape(-1, HIDDEN)
    seg4 = W3T[1536:1920].reshape(C_OUT, L_SHORT, HIDDEN).transpose(1, 0, 2).reshape(-1, HIDDEN)
    seg5 = W3T[1920:2048]                    # split5 block (no ReLU -> fold exactly)
    w3p = jnp.concatenate([seg0, seg1, seg2, seg3, seg4], axis=0)   # [1920, 256]

    w2_eff = (w2 @ seg5).reshape(1, HIDDEN)                 # rank-1 split5 weight
    b3_tot = (p["b3"] + p["b2"] @ seg5).reshape(1, HIDDEN)  # b3 + folded b2

    w4 = p["w4"].T                           # [256, 6]
    b4 = p["b4"].reshape(1, ACT_DIM)

    if use_bf16:
        # MXU operands only; biases / elementwise stay f32 (v5e-friendly).
        M = M.astype(jnp.bfloat16)
        w3p = w3p.astype(jnp.bfloat16)
        w4 = w4.astype(jnp.bfloat16)
    return (M, bfeat, w3p, b3_tot, w2_eff, w4, b4)


# ---------------------------------------------------------------------------
# Wrapper: flatten x, pad batch, tile the batch axis with a parallel grid.
# ---------------------------------------------------------------------------
def actor_forward(x, params, use_bf16=True, tb=None, use_core_parallel=False):
    compute_dtype = jnp.bfloat16 if use_bf16 else jnp.float32
    x = x.astype(jnp.float32).reshape(-1, XF)     # mirrors torch .view(-1, s0, s1)
    B = x.shape[0]
    if tb is None:
        # 512 amortizes per-grid-step overhead + W3 restaging and stays inside
        # v5e's 16 MiB default scoped VMEM; on v6e/v7x tb=1024 also fits
        # (pass it explicitly for very large batches).
        tb = 512 if B >= 512 else _round_up(max(B, 1), 8)
    B_pad = _round_up(B, tb)
    x = x.astype(compute_dtype)                   # bf16 LHS on the fast path
    if B_pad != B:
        x = jnp.concatenate(
            [x, jnp.zeros((B_pad - B, XF), compute_dtype)], axis=0)

    kparams = prep_kernel_params(params, use_bf16=use_bf16)
    tk = _pick_feat_chunk(tb)

    in_specs = [pl.BlockSpec((tb, XF), lambda i: (i, 0))]
    # Weight/bias blocks: constant index_map -> DMA'd from HBM once, stay
    # VMEM-resident across all grid steps.
    in_specs += [pl.BlockSpec(w.shape, lambda i: (0, 0)) for w in kparams]

    # On v7x, CORE_PARALLEL shards the batch grid across both TensorCores
    # (plain "parallel" does not); only enable it when the grid has >= 2 steps.
    dim_sem = (pltpu.CORE_PARALLEL,) if use_core_parallel else ("parallel",)

    out = pl.pallas_call(
        partial(actor_kernel, tk=tk, approx_recip=use_bf16),
        out_shape=jax.ShapeDtypeStruct((B_pad, ACT_DIM), jnp.float32),
        grid=(B_pad // tb,),
        in_specs=in_specs,
        out_specs=pl.BlockSpec((tb, ACT_DIM), lambda i: (i, 0)),
        scratch_shapes=[pltpu.VMEM((tb, NF), compute_dtype)],   # bf16 feat only
        compiler_params=pltpu.CompilerParams(
            dimension_semantics=dim_sem,
            vmem_limit_bytes=32 * 1024 * 1024),
    )(x, *kparams)
    return out[:B]


# ---------------------------------------------------------------------------
# Pure-JAX reference mirroring the PyTorch forward exactly (for validation).
# ---------------------------------------------------------------------------
def ref_forward(x, p):
    x = x.astype(jnp.float32).reshape(-1, S0, S1)
    relu = lambda v: jnp.maximum(v, 0.0)
    s0 = relu(x[:, 0, -1:] @ p["w0"].T + p["b0"])
    s1 = relu(x[:, 1, -1:] @ p["w1"].T + p["b1"])
    s5 = x[:, 5, -1:] @ p["w2"].T + p["b2"]

    def conv(inp):                                   # inp: [B, L_in]
        L = inp.shape[1] - K + 1
        patches = jnp.stack([inp[:, t:t + K] for t in range(L)], axis=1)
        out = jnp.einsum("blk,ck->bcl", patches, p["wc"][:, 0, :]) + p["bc"][None, :, None]
        return relu(out)

    B = x.shape[0]
    c2 = conv(x[:, 2, :]).reshape(B, -1)
    c3 = conv(x[:, 3, :]).reshape(B, -1)
    c4 = conv(x[:, 4, :A_DIM]).reshape(B, -1)
    feat = jnp.concatenate([s0, s1, c2, c3, c4, s5], axis=1)
    h = relu(feat @ p["w3"].T + p["b3"])
    logits = h @ p["w4"].T + p["b4"]
    return jax.nn.softmax(logits, axis=1)


if __name__ == "__main__":
    key = jax.random.PRNGKey(0)
    kp, kx = jax.random.split(key)
    params = make_params(kp)

    # Small shape consistent with the module: batch=2, state_dim=[6, 8].
    x = jax.random.normal(kx, (2, S0, S1), jnp.float32)
    ref = ref_forward(x, params)

    # f32 path: tight correctness validation (exact reciprocal in the softmax).
    out_f32 = actor_forward(x, params, use_bf16=False)
    jax.block_until_ready(out_f32)
    assert out_f32.shape == (2, ACT_DIM)
    assert jnp.allclose(out_f32, ref, atol=1e-4, rtol=1e-4), (out_f32, ref)
    assert jnp.allclose(jnp.sum(out_f32, axis=1), 1.0, atol=1e-4)

    # bf16-MXU fast path (default): looser tolerance vs the f32 reference.
    out_bf = actor_forward(x, params, use_bf16=True)
    jax.block_until_ready(out_bf)
    assert out_bf.shape == (2, ACT_DIM)
    assert jnp.allclose(out_bf, ref, atol=5e-2, rtol=5e-2), (out_bf, ref)
    assert jnp.allclose(jnp.sum(out_bf, axis=1), 1.0, atol=1e-2)

    # Larger batch: exercises batch padding (1030 -> 1536), the multi-step
    # batch grid (tb=512, 3 steps) and the chunked feature stage.
    xb = jax.random.normal(jax.random.PRNGKey(1), (1030, S0, S1), jnp.float32)
    out_big = actor_forward(xb, params, use_bf16=True)
    jax.block_until_ready(out_big)
    ref_big = ref_forward(xb, params)
    assert out_big.shape == (1030, ACT_DIM)
    assert jnp.allclose(out_big, ref_big, atol=5e-2, rtol=5e-2)

    print("KERNEL_OK")
</pallas_src>

<mosaic_0001>
module attributes {stable_mosaic.version = 11 : i64} {
  func.func @actor_kernel(%arg0: i32, %arg1: memref<8x48xf32, #tpu.memory_space<vmem>>, %arg2: memref<48x1920xf32, #tpu.memory_space<vmem>>, %arg3: memref<1x1920xf32, #tpu.memory_space<vmem>>, %arg4: memref<1920x256xf32, #tpu.memory_space<vmem>>, %arg5: memref<1x256xf32, #tpu.memory_space<vmem>>, %arg6: memref<1x256xf32, #tpu.memory_space<vmem>>, %arg7: memref<256x6xf32, #tpu.memory_space<vmem>>, %arg8: memref<1x6xf32, #tpu.memory_space<vmem>>, %arg9: memref<8x6xf32, #tpu.memory_space<vmem>>, %arg10: memref<8x1920xf32, #tpu.memory_space<vmem>>) attributes {dimension_semantics = [#tpu.dimension_semantics<parallel>], iteration_bounds = array<i64: 1>, scalar_prefetch = 0 : i64, scratch_operands = 1 : i64, tpu.core_type = #tpu.core_type<tc>, window_params = [{transform_indices = @transform_0, window_bounds = array<i64: 8, 48>}, {pipeline_mode = #tpu.pipeline_mode<synchronous>, transform_indices = @transform_1, window_bounds = array<i64: 48, 1920>}, {pipeline_mode = #tpu.pipeline_mode<synchronous>, transform_indices = @transform_2, window_bounds = array<i64: 1, 1920>}, {pipeline_mode = #tpu.pipeline_mode<synchronous>, transform_indices = @transform_3, window_bounds = array<i64: 1920, 256>}, {pipeline_mode = #tpu.pipeline_mode<synchronous>, transform_indices = @transform_4, window_bounds = array<i64: 1, 256>}, {pipeline_mode = #tpu.pipeline_mode<synchronous>, transform_indices = @transform_5, window_bounds = array<i64: 1, 256>}, {pipeline_mode = #tpu.pipeline_mode<synchronous>, transform_indices = @transform_6, window_bounds = array<i64: 256, 6>}, {pipeline_mode = #tpu.pipeline_mode<synchronous>, transform_indices = @transform_7, window_bounds = array<i64: 1, 6>}, {transform_indices = @transform_8, window_bounds = array<i64: 8, 6>}]} {
    %c0 = arith.constant 0 : index
    %c0_0 = arith.constant 0 : index
    %0 = vector.load %arg1[%c0, %c0_0] : memref<8x48xf32, #tpu.memory_space<vmem>>, vector<8x48xf32>
    %c0_1 = arith.constant 0 : index
    %c0_2 = arith.constant 0 : index
    %1 = vector.load %arg2[%c0_1, %c0_2] : memref<48x1920xf32, #tpu.memory_space<vmem>>, vector<48x1920xf32>
    %cst = arith.constant dense<0.000000e+00> : vector<8x1920xf32>
    %2 = tpu.matmul %0, %1, %cst {dimension_numbers = #tpu.dot_dimension_numbers<[1], [0], [0], [1], [0, 0, 1, 1], [], []>} : vector<8x48xf32>, vector<48x1920xf32>, vector<8x1920xf32> -> vector<8x1920xf32>
    %c0_3 = arith.constant 0 : index
    %c0_4 = arith.constant 0 : index
    %3 = vector.load %arg3[%c0_3, %c0_4] : memref<1x1920xf32, #tpu.memory_space<vmem>>, vector<1x1920xf32>
    %4 = vector.broadcast %3 : vector<1x1920xf32> to vector<8x1920xf32>
    %5 = arith.addf %2, %4 : vector<8x1920xf32>
    %cst_5 = arith.constant 0.000000e+00 : f32
    %6 = vector.broadcast %cst_5 : f32 to vector<8x1920xf32>
    %7 = arith.maximumf %5, %6 : vector<8x1920xf32>
    %c0_6 = arith.constant 0 : index
    %c0_7 = arith.constant 0 : index
    %8 = vector.load %arg10[%c0_6, %c0_7] : memref<8x1920xf32, #tpu.memory_space<vmem>>, vector<8x1920xf32>
    tpu.vector_store %arg10[%c0_6, %c0_7], %7 {strides = array<i32>} : memref<8x1920xf32, #tpu.memory_space<vmem>>, vector<8x1920xf32>,
    %9 = vector.extract_strided_slice %0 {offsets = [0, 47], sizes = [8, 1], strides = [1, 1]} : vector<8x48xf32> to vector<8x1xf32>
    %c0_8 = arith.constant 0 : index
    %c0_9 = arith.constant 0 : index
    %10 = vector.load %arg10[%c0_8, %c0_9] : memref<8x1920xf32, #tpu.memory_space<vmem>>, vector<8x1920xf32>
    %c0_10 = arith.constant 0 : index
    %c0_11 = arith.constant 0 : index
    %11 = vector.load %arg4[%c0_10, %c0_11] : memref<1920x256xf32, #tpu.memory_space<vmem>>, vector<1920x256xf32>
    %cst_12 = arith.constant dense<0.000000e+00> : vector<8x256xf32>
    %12 = tpu.matmul %10, %11, %cst_12 {dimension_numbers = #tpu.dot_dimension_numbers<[1], [0], [0], [1], [0, 0, 1, 1], [], []>} : vector<8x1920xf32>, vector<1920x256xf32>, vector<8x256xf32> -> vector<8x256xf32>
    %c0_13 = arith.constant 0 : index
    %c0_14 = arith.constant 0 : index
    %13 = vector.load %arg5[%c0_13, %c0_14] : memref<1x256xf32, #tpu.memory_space<vmem>>, vector<1x256xf32>
    %14 = vector.broadcast %13 : vector<1x256xf32> to vector<8x256xf32>
    %15 = arith.addf %12, %14 : vector<8x256xf32>
    %c0_15 = arith.constant 0 : index
    %c0_16 = arith.constant 0 : index
    %16 = vector.load %arg6[%c0_15, %c0_16] : memref<1x256xf32, #tpu.memory_space<vmem>>, vector<1x256xf32>
    %17 = vector.broadcast %9 : vector<8x1xf32> to vector<8x256xf32>
    %18 = vector.broadcast %16 : vector<1x256xf32> to vector<8x256xf32>
    %19 = arith.mulf %17, %18 : vector<8x256xf32>
    %20 = arith.addf %15, %19 : vector<8x256xf32>
    %cst_17 = arith.constant 0.000000e+00 : f32
    %21 = vector.broadcast %cst_17 : f32 to vector<8x256xf32>
    %22 = arith.maximumf %20, %21 : vector<8x256xf32>
    %c0_18 = arith.constant 0 : index
    %c0_19 = arith.constant 0 : index
    %23 = vector.load %arg7[%c0_18, %c0_19] : memref<256x6xf32, #tpu.memory_space<vmem>>, vector<256x6xf32>
    %cst_20 = arith.constant dense<0.000000e+00> : vector<8x6xf32>
    %24 = tpu.matmul %22, %23, %cst_20 {dimension_numbers = #tpu.dot_dimension_numbers<[1], [0], [0], [1], [0, 0, 1, 1], [], []>} : vector<8x256xf32>, vector<256x6xf32>, vector<8x6xf32> -> vector<8x6xf32>
    %c0_21 = arith.constant 0 : index
    %c0_22 = arith.constant 0 : index
    %25 = vector.load %arg8[%c0_21, %c0_22] : memref<1x6xf32, #tpu.memory_space<vmem>>, vector<1x6xf32>
    %26 = vector.broadcast %25 : vector<1x6xf32> to vector<8x6xf32>
    %27 = arith.addf %24, %26 : vector<8x6xf32>
    %cst_23 = arith.constant dense<0xFF800000> : vector<8xf32>
    %28 = vector.multi_reduction <maximumf>, %27, %cst_23 [1] : vector<8x6xf32> to vector<8xf32>
    %29 = vector.shape_cast %28 : vector<8xf32> to vector<8x1xf32>
    %30 = vector.broadcast %29 : vector<8x1xf32> to vector<8x6xf32>
    %31 = arith.subf %27, %30 : vector<8x6xf32>
    %32 = math.exp %31 : vector<8x6xf32>
    %cst_24 = arith.constant dense<0.000000e+00> : vector<8xf32>
    %33 = vector.multi_reduction <add>, %32, %cst_24 [1] : vector<8x6xf32> to vector<8xf32>
    %34 = vector.shape_cast %33 : vector<8xf32> to vector<8x1xf32>
    %35 = tpu.reciprocal %34 : vector<8x1xf32> -> vector<8x1xf32>
    %36 = vector.broadcast %35 : vector<8x1xf32> to vector<8x6xf32>
    %37 = arith.mulf %32, %36 : vector<8x6xf32>
    %c0_25 = arith.constant 0 : index
    %c0_26 = arith.constant 0 : index
    %38 = vector.load %arg9[%c0_25, %c0_26] : memref<8x6xf32, #tpu.memory_space<vmem>>, vector<8x6xf32>
    tpu.vector_store %arg9[%c0_25, %c0_26], %37 {strides = array<i32>} : memref<8x6xf32, #tpu.memory_space<vmem>>, vector<8x6xf32>,
    return
  }
  func.func @transform_0(%arg0: i32) -> (i32, i32) {
    %c0_i32 = arith.constant 0 : i32
    %c0_i32_0 = arith.constant 0 : i32
    return %arg0, %c0_i32 : i32, i32
  }
  func.func @transform_1(%arg0: i32) -> (i32, i32) {
    %c0_i32 = arith.constant 0 : i32
    %c0_i32_0 = arith.constant 0 : i32
    %c0_i32_1 = arith.constant 0 : i32
    return %c0_i32, %c0_i32_0 : i32, i32
  }
  func.func @transform_2(%arg0: i32) -> (i32, i32) {
    %c0_i32 = arith.constant 0 : i32
    %c0_i32_0 = arith.constant 0 : i32
    %c0_i32_1 = arith.constant 0 : i32
    return %c0_i32, %c0_i32_0 : i32, i32
  }
  func.func @transform_3(%arg0: i32) -> (i32, i32) {
    %c0_i32 = arith.constant 0 : i32
    %c0_i32_0 = arith.constant 0 : i32
    %c0_i32_1 = arith.constant 0 : i32
    return %c0_i32, %c0_i32_0 : i32, i32
  }
  func.func @transform_4(%arg0: i32) -> (i32, i32) {
    %c0_i32 = arith.constant 0 : i32
    %c0_i32_0 = arith.constant 0 : i32
    %c0_i32_1 = arith.constant 0 : i32
    return %c0_i32, %c0_i32_0 : i32, i32
  }
  func.func @transform_5(%arg0: i32) -> (i32, i32) {
    %c0_i32 = arith.constant 0 : i32
    %c0_i32_0 = arith.constant 0 : i32
    %c0_i32_1 = arith.constant 0 : i32
    return %c0_i32, %c0_i32_0 : i32, i32
  }
  func.func @transform_6(%arg0: i32) -> (i32, i32) {
    %c0_i32 = arith.constant 0 : i32
    %c0_i32_0 = arith.constant 0 : i32
    %c0_i32_1 = arith.constant 0 : i32
    return %c0_i32, %c0_i32_0 : i32, i32
  }
  func.func @transform_7(%arg0: i32) -> (i32, i32) {
    %c0_i32 = arith.constant 0 : i32
    %c0_i32_0 = arith.constant 0 : i32
    %c0_i32_1 = arith.constant 0 : i32
    return %c0_i32, %c0_i32_0 : i32, i32
  }
  func.func @transform_8(%arg0: i32) -> (i32, i32) {
    %c0_i32 = arith.constant 0 : i32
    %c0_i32_0 = arith.constant 0 : i32
    return %arg0, %c0_i32 : i32, i32
  }
}

</mosaic_0001>

<llo_original>
// kernel: tpu_custom_call.1
$region0: #{tpu_custom_call.1}
  #allocation0 [shape = 'u32[]', space=smem, size = 0x4, offset = 0x4, fixed_abs, tag = 'smem constant byte address 0x4 - core index']
  #allocation1 [shape = 'u32[144,128]{1,0:T(1,128)}', space=vmem, size = 0x12000, scoped, tag = 'internal scratch']
  #allocation2 [shape = 'f32[8,1920]{1,0:T(8,128)}', space=vmem, size = 0xf000, scoped, tag = 'scratch operand']
  %s0 = inlined_call_operand.hbm [shape: f32[8,48], index: 0, kind: input, shape index: {}]
  %s1 = inlined_call_operand.hbm [shape: f32[48,1920], index: 1, kind: input, shape index: {}]
  %s2 = inlined_call_operand.hbm [shape: f32[1,1920], index: 2, kind: input, shape index: {}]
  %s3 = inlined_call_operand.hbm [shape: f32[1920,256], index: 3, kind: input, shape index: {}]
  %s4 = inlined_call_operand.hbm [shape: f32[1,256], index: 4, kind: input, shape index: {}]
  %s5 = inlined_call_operand.hbm [shape: f32[1,256], index: 5, kind: input, shape index: {}]
  %s6 = inlined_call_operand.vmem [shape: f32[256,6], index: 6, kind: input, shape index: {}]
  %s7 = inlined_call_operand.hbm [shape: f32[1,6], index: 7, kind: input, shape index: {}]
  %s8 = inlined_call_operand.hbm [shape: f32[8,6], index: 8, kind: output, shape index: {}]
  %s9 = sld [smem:[#allocation0]]
  $region70: #{tpu_custom_call.1} parent=0
    _
  %s11 = ssub.s32 1, %s9
  %s12 = scalar_select 0, %s11, %s9
  $region1: #{tpu_custom_call.1} parent=0
    #allocation3 [shape = 'u8[4096]{0}', space=vmem, size = 0x1000, scoped, tag = 'input window, operand 0, single buffered']
    #allocation4 [shape = 's32[1]{0}', space=sflag, size = 0x4, scoped, tag = 'scoped memory for tpu_custom_call.1']
    #allocation5 [shape = 's32[1]{0}', space=sflag, size = 0x4, scoped, tag = 'scoped memory for tpu_custom_call.1']
    #allocation6 [shape = 'u8[368640]{0}', space=vmem, size = 0x5a000, scoped, tag = 'input window, operand 1, single buffered']
    #allocation7 [shape = 's32[1]{0}', space=sflag, size = 0x4, scoped, tag = 'scoped memory for tpu_custom_call.1']
    #allocation8 [shape = 'u8[7680]{0}', space=vmem, size = 0x2000, scoped, tag = 'input window, operand 2, single buffered']
    #allocation9 [shape = 'u8[1966080]{0}', space=vmem, size = 0x1e0000, scoped, tag = 'input window, operand 3, single buffered']
    #allocation10 [shape = 's32[1]{0}', space=sflag, size = 0x4, scoped, tag = 'scoped memory for tpu_custom_call.1']
    #allocation11 [shape = 'u8[1024]{0}', space=vmem, size = 0x400, scoped, tag = 'input window, operand 4, single buffered']
    #allocation12 [shape = 'u8[1024]{0}', space=vmem, size = 0x400, scoped, tag = 'input window, operand 5, single buffered']
    #allocation13 [shape = 's32[1]{0}', space=sflag, size = 0x4, scoped, tag = 'scoped memory for tpu_custom_call.1']
    #allocation14 [shape = 'u8[512]{0}', space=vmem, size = 0x400, scoped, tag = 'input window, operand 7, single buffered']
    #allocation15 [shape = 'u8[4096]{0}', space=vmem, size = 0x1000, scoped, tag = 'output window, operand 0, single buffered']
    %13 = vsyncpa [#allocation4], 0
    %14 = vsyncpa [#allocation7], 0
    %15 = vsyncpa [#allocation10], 0
    %16 = vsyncpa [#allocation13], 0
    %17 = vsyncpa [#allocation5], 0
    // Predicated region
    $region2: #{tpu_custom_call.1} parent=1 // pred_check
      _
    $region3: #{tpu_custom_call.1} parent=1 // pred_check_branch
      %19 = sbr.rel (0) target = $region5
    $region4: #{tpu_custom_call.1} parent=1 // pred_region
      %s21 = ssub.s32 128, 128
      %22 = vsyncadd [#allocation4], %s21
      %s24 = sshll.u32 [#allocation3], 4
      %s25 = int_to_ptr.vmem [resolvable:$true] %s24
      %27 = dma.hbm_to_vmem [thread:$0]  %s0, 128, %s25, [#allocation4]
    $region5: #{tpu_custom_call.1} parent=1 // pred_fallthru
      _
    // Predicated region
    $region6: #{tpu_custom_call.1} parent=1 // pred_check
      _
    $region7: #{tpu_custom_call.1} parent=1 // pred_check_branch
      %29 = sbr.rel (0) target = $region9
    $region8: #{tpu_custom_call.1} parent=1 // pred_region
      %s31 = ssub.s32 11520, 11520
      %32 = vsyncadd [#allocation7], %s31
      %s33 = sshll.u32 [#allocation6], 4
      %s34 = int_to_ptr.vmem [resolvable:$true] %s33
      %39 = dma.hbm_to_vmem [thread:$0]  %s1, 11520, %s34, [#allocation7], 1920, 1920, 120
    $region9: #{tpu_custom_call.1} parent=1 // pred_fallthru
      _
    // Predicated region
    $region10: #{tpu_custom_call.1} parent=1 // pred_check
      _
    $region11: #{tpu_custom_call.1} parent=1 // pred_check_branch
      %41 = sbr.rel (0) target = $region13
    $region12: #{tpu_custom_call.1} parent=1 // pred_region
      %s43 = ssub.s32 240, 240
      %44 = vsyncadd [#allocation7], %s43
      %s46 = sshll.u32 [#allocation8], 4
      %s47 = int_to_ptr.vmem [resolvable:$true] %s46
      %49 = dma.hbm_to_vmem [thread:$0]  %s2, 240, %s47, [#allocation7]
    $region13: #{tpu_custom_call.1} parent=1 // pred_fallthru
      _
    // Predicated region
    $region14: #{tpu_custom_call.1} parent=1 // pred_check
      _
    $region15: #{tpu_custom_call.1} parent=1 // pred_check_branch
      %51 = sbr.rel (0) target = $region17
    $region16: #{tpu_custom_call.1} parent=1 // pred_region
      %s53 = ssub.s32 61440, 61440
      %54 = vsyncadd [#allocation10], %s53
      %s55 = sshll.u32 [#allocation9], 4
      %s56 = int_to_ptr.vmem [resolvable:$true] %s55
      %61 = dma.hbm_to_vmem [thread:$0]  %s3, 61440, %s56, [#allocation10], 256, 256, 16
    $region17: #{tpu_custom_call.1} parent=1 // pred_fallthru
      _
    // Predicated region
    $region18: #{tpu_custom_call.1} parent=1 // pred_check
      _
    $region19: #{tpu_custom_call.1} parent=1 // pred_check_branch
      %63 = sbr.rel (0) target = $region21
    $region20: #{tpu_custom_call.1} parent=1 // pred_region
      %s65 = ssub.s32 32, 32
      %66 = vsyncadd [#allocation10], %s65
      %s68 = sshll.u32 [#allocation11], 4
      %s69 = int_to_ptr.vmem [resolvable:$true] %s68
      %71 = dma.hbm_to_vmem [thread:$0]  %s4, 32, %s69, [#allocation10]
    $region21: #{tpu_custom_call.1} parent=1 // pred_fallthru
      _
    // Predicated region
    $region22: #{tpu_custom_call.1} parent=1 // pred_check
      _
    $region23: #{tpu_custom_call.1} parent=1 // pred_check_branch
      %73 = sbr.rel (0) target = $region25
    $region24: #{tpu_custom_call.1} parent=1 // pred_region
      %s75 = ssub.s32 32, 32
      %76 = vsyncadd [#allocation13], %s75
      %s78 = sshll.u32 [#allocation12], 4
      %s79 = int_to_ptr.vmem [resolvable:$true] %s78
      %81 = dma.hbm_to_vmem [thread:$0]  %s5, 32, %s79, [#allocation13]
    $region25: #{tpu_custom_call.1} parent=1 // pred_fallthru
      _
    // Predicated region
    $region26: #{tpu_custom_call.1} parent=1 // pred_check
      _
    $region27: #{tpu_custom_call.1} parent=1 // pred_check_branch
      %83 = sbr.rel (0) target = $region29
    $region28: #{tpu_custom_call.1} parent=1 // pred_region
      _
    $region29: #{tpu_custom_call.1} parent=1 // pred_fallthru
      _
    // Predicated region
    $region30: #{tpu_custom_call.1} parent=1 // pred_check
      _
    $region31: #{tpu_custom_call.1} parent=1 // pred_check_branch
      %85 = sbr.rel (0) target = $region33
    $region32: #{tpu_custom_call.1} parent=1 // pred_region
      %s87 = ssub.s32 16, 16
      %88 = vsyncadd [#allocation13], %s87
      %s90 = sshll.u32 [#allocation14], 4
      %s91 = int_to_ptr.vmem [resolvable:$true] %s90
      %93 = dma.hbm_to_vmem [thread:$0]  %s7, 16, %s91, [#allocation13]
    $region33: #{tpu_custom_call.1} parent=1 // pred_fallthru
      _
    // Predicated region
    $region34: #{tpu_custom_call.1} parent=1 // pred_check
      _
    $region35: #{tpu_custom_call.1} parent=1 // pred_check_branch
      %95 = sbr.rel (0) target = $region37
    $region36: #{tpu_custom_call.1} parent=1 // pred_region
      %96 = dma.done [#allocation4], 128
    $region37: #{tpu_custom_call.1} parent=1 // pred_fallthru
      _
    // Predicated region
    $region38: #{tpu_custom_call.1} parent=1 // pred_check
      _
    $region39: #{tpu_custom_call.1} parent=1 // pred_check_branch
      %98 = sbr.rel (0) target = $region41
    $region40: #{tpu_custom_call.1} parent=1 // pred_region
      %99 = dma.done [#allocation7], 11520
    $region41: #{tpu_custom_call.1} parent=1 // pred_fallthru
      _
    // Predicated region
    $region42: #{tpu_custom_call.1} parent=1 // pred_check
      _
    $region43: #{tpu_custom_call.1} parent=1 // pred_check_branch
      %101 = sbr.rel (0) target = $region45
    $region44: #{tpu_custom_call.1} parent=1 // pred_region
      %102 = dma.done [#allocation7], 240
    $region45: #{tpu_custom_call.1} parent=1 // pred_fallthru
      _
    // Predicated region
    $region46: #{tpu_custom_call.1} parent=1 // pred_check
      _
    $region47: #{tpu_custom_call.1} parent=1 // pred_check_branch
      %104 = sbr.rel (0) target = $region49
    $region48: #{tpu_custom_call.1} parent=1 // pred_region
      %105 = dma.done [#allocation10], 61440
    $region49: #{tpu_custom_call.1} parent=1 // pred_fallthru
      _
    // Predicated region
    $region50: #{tpu_custom_call.1} parent=1 // pred_check
      _
    $region51: #{tpu_custom_call.1} parent=1 // pred_check_branch
      %107 = sbr.rel (0) target = $region53
    $region52: #{tpu_custom_call.1} parent=1 // pred_region
      %108 = dma.done [#allocation10], 32
    $region53: #{tpu_custom_call.1} parent=1 // pred_fallthru
      _
    // Predicated region
    $region54: #{tpu_custom_call.1} parent=1 // pred_check
      _
    $region55: #{tpu_custom_call.1} parent=1 // pred_check_branch
      %110 = sbr.rel (0) target = $region57
    $region56: #{tpu_custom_call.1} parent=1 // pred_region
      %111 = dma.done [#allocation13], 32
    $region57: #{tpu_custom_call.1} parent=1 // pred_fallthru
      _
    // Predicated region
    $region58: #{tpu_custom_call.1} parent=1 // pred_check
      _
    $region59: #{tpu_custom_call.1} parent=1 // pred_check_branch
      %113 = sbr.rel (0) target = $region61
    $region60: #{tpu_custom_call.1} parent=1 // pred_region
      %114 = dma.done [#allocation13], 16
    $region61: #{tpu_custom_call.1} parent=1 // pred_fallthru
      _
    %v115 = vld [vmem:[#allocation3] sm:$0xff]
    %v116 = vld [vmem:[#allocation6] sm:$0xff]
    %v117 = vld [vmem:[#allocation6 + $0x8] sm:$0xff]
    %v118 = vld [vmem:[#allocation6 + $0x10] sm:$0xff]
    %v119 = vld [vmem:[#allocation6 + $0x18] sm:$0xff]
    %v120 = vld [vmem:[#allocation6 + $0x20] sm:$0xff]
    %v121 = vld [vmem:[#allocation6 + $0x28] sm:$0xff]
    %v122 = vld [vmem:[#allocation6 + $0x30] sm:$0xff]
    %v123 = vld [vmem:[#allocation6 + $0x38] sm:$0xff]
    %v124 = vld [vmem:[#allocation6 + $0x40] sm:$0xff]
    %v125 = vld [vmem:[#allocation6 + $0x48] sm:$0xff]
    %v126 = vld [vmem:[#allocation6 + $0x50] sm:$0xff]
    %v127 = vld [vmem:[#allocation6 + $0x58] sm:$0xff]
    %v128 = vld [vmem:[#allocation6 + $0x60] sm:$0xff]
    %v129 = vld [vmem:[#allocation6 + $0x68] sm:$0xff]
    %v130 = vld [vmem:[#allocation6 + $0x70] sm:$0xff]
    %v131 = vld [vmem:[#allocation6 + $0x78] sm:$0xff]
    %v132 = vld [vmem:[#allocation6 + $0x80] sm:$0xff]
    %v133 = vld [vmem:[#allocation6 + $0x88] sm:$0xff]
    %v134 = vld [vmem:[#allocation6 + $0x90] sm:$0xff]
    %v135 = vld [vmem:[#allocation6 + $0x98] sm:$0xff]
    %v136 = vld [vmem:[#allocation6 + $0xa0] sm:$0xff]
    %v137 = vld [vmem:[#allocation6 + $0xa8] sm:$0xff]
    %v138 = vld [vmem:[#allocation6 + $0xb0] sm:$0xff]
    %v139 = vld [vmem:[#allocation6 + $0xb8] sm:$0xff]
    %v140 = vld [vmem:[#allocation6 + $0xc0] sm:$0xff]
    %v141 = vld [vmem:[#allocation6 + $0xc8] sm:$0xff]
    %v142 = vld [vmem:[#allocation6 + $0xd0] sm:$0xff]
    %v143 = vld [vmem:[#allocation6 + $0xd8] sm:$0xff]
    %v144 = vld [vmem:[#allocation6 + $0xe0] sm:$0xff]
    %v145 = vld [vmem:[#allocation6 + $0xe8] sm:$0xff]
    %v146 = vld [vmem:[#allocation6 + $0xf0] sm:$0xff]
    %v147 = vld [vmem:[#allocation6 + $0xf8] sm:$0xff]
    %v148 = vld [vmem:[#allocation6 + $0x100] sm:$0xff]
    %v149 = vld [vmem:[#allocation6 + $0x108] sm:$0xff]
    %v150 = vld [vmem:[#allocation6 + $0x110] sm:$0xff]
    %v151 = vld [vmem:[#allocation6 + $0x118] sm:$0xff]
    %v152 = vld [vmem:[#allocation6 + $0x120] sm:$0xff]
    %v153 = vld [vmem:[#allocation6 + $0x128] sm:$0xff]
    %v154 = vld [vmem:[#allocation6 + $0x130] sm:$0xff]
    %v155 = vld [vmem:[#allocation6 + $0x138] sm:$0xff]
    %v156 = vld [vmem:[#allocation6 + $0x140] sm:$0xff]
    %v157 = vld [vmem:[#allocation6 + $0x148] sm:$0xff]
    %v158 = vld [vmem:[#allocation6 + $0x150] sm:$0xff]
    %v159 = vld [vmem:[#allocation6 + $0x158] sm:$0xff]
    %v160 = vld [vmem:[#allocation6 + $0x160] sm:$0xff]
    %v161 = vld [vmem:[#allocation6 + $0x168] sm:$0xff]
    %v162 = vld [vmem:[#allocation6 + $0x170] sm:$0xff]
    %v163 = vld [vmem:[#allocation6 + $0x178] sm:$0xff]
    %v164 = vld [vmem:[#allocation6 + $0x180] sm:$0xff]
    %v165 = vld [vmem:[#allocation6 + $0x188] sm:$0xff]
    %v166 = vld [vmem:[#allocation6 + $0x190] sm:$0xff]
    %v167 = vld [vmem:[#allocation6 + $0x198] sm:$0xff]
    %v168 = vld [vmem:[#allocation6 + $0x1a0] sm:$0xff]
    %v169 = vld [vmem:[#allocation6 + $0x1a8] sm:$0xff]
    %v170 = vld [vmem:[#allocation6 + $0x1b0] sm:$0xff]
    %v171 = vld [vmem:[#allocation6 + $0x1b8] sm:$0xff]
    %v172 = vld [vmem:[#allocation6 + $0x1c0] sm:$0xff]
    %v173 = vld [vmem:[#allocation6 + $0x1c8] sm:$0xff]
    %v174 = vld [vmem:[#allocation6 + $0x1d0] sm:$0xff]
    %v175 = vld [vmem:[#allocation6 + $0x1d8] sm:$0xff]
    %v176 = vld [vmem:[#allocation6 + $0x1e0] sm:$0xff]
    %v177 = vld [vmem:[#allocation6 + $0x1e8] sm:$0xff]
    %v178 = vld [vmem:[#allocation6 + $0x1f0] sm:$0xff]
    %v179 = vld [vmem:[#allocation6 + $0x1f8] sm:$0xff]
    %v180 = vld [vmem:[#allocation6 + $0x200] sm:$0xff]
    %v181 = vld [vmem:[#allocation6 + $0x208] sm:$0xff]
    %v182 = vld [vmem:[#allocation6 + $0x210] sm:$0xff]
    %v183 = vld [vmem:[#allocation6 + $0x218] sm:$0xff]
    %v184 = vld [vmem:[#allocation6 + $0x220] sm:$0xff]
    %v185 = vld [vmem:[#allocation6 + $0x228] sm:$0xff]
    %v186 = vld [vmem:[#allocation6 + $0x230] sm:$0xff]
    %v187 = vld [vmem:[#allocation6 + $0x238] sm:$0xff]
    %v188 = vld [vmem:[#allocation6 + $0x240] sm:$0xff]
    %v189 = vld [vmem:[#allocation6 + $0x248] sm:$0xff]
    %v190 = vld [vmem:[#allocation6 + $0x250] sm:$0xff]
    %v191 = vld [vmem:[#allocation6 + $0x258] sm:$0xff]
    %v192 = vld [vmem:[#allocation6 + $0x260] sm:$0xff]
    %v193 = vld [vmem:[#allocation6 + $0x268] sm:$0xff]
    %v194 = vld [vmem:[#allocation6 + $0x270] sm:$0xff]
    %v195 = vld [vmem:[#allocation6 + $0x278] sm:$0xff]
    %v196 = vld [vmem:[#allocation6 + $0x280] sm:$0xff]
    %v197 = vld [vmem:[#allocation6 + $0x288] sm:$0xff]
    %v198 = vld [vmem:[#allocation6 + $0x290] sm:$0xff]
    %v199 = vld [vmem:[#allocation6 + $0x298] sm:$0xff]
    %v200 = vld [vmem:[#allocation6 + $0x2a0] sm:$0xff]
    %v201 = vld [vmem:[#allocation6 + $0x2a8] sm:$0xff]
    %v202 = vld [vmem:[#allocation6 + $0x2b0] sm:$0xff]
    %v203 = vld [vmem:[#allocation6 + $0x2b8] sm:$0xff]
    %v204 = vld [vmem:[#allocation6 + $0x2c0] sm:$0xff]
    %v205 = vld [vmem:[#allocation6 + $0x2c8] sm:$0xff]
    %v206 = vld [vmem:[#allocation8] sm:$0xff]
    %v207 = vld [vmem:[#allocation8 + $0x8] sm:$0xff]
    %v210 = vlaneseq
    %v211 = vshrl.u32 %v210, 7
    %v212 = vsub.s32 0, %v211
    %v213 = vrot.slane %v206, %v212
    %v214 = vlaneseq
    %v215 = vshrl.u32 %v214, 7
    %v216 = vsub.s32 1, %v215
    %v217 = vrot.slane %v206, %v216
    %v218 = vlaneseq
    %v219 = vshrl.u32 %v218, 7
    %v220 = vsub.s32 2, %v219
    %v221 = vrot.slane %v206, %v220
    %v222 = vlaneseq
    %v223 = vshrl.u32 %v222, 7
    %v224 = vsub.s32 3, %v223
    %v225 = vrot.slane %v206, %v224
    %v226 = vlaneseq
    %v227 = vshrl.u32 %v226, 7
    %v228 = vsub.s32 4, %v227
    %v229 = vrot.slane %v206, %v228
    %v230 = vlaneseq
    %v231 = vshrl.u32 %v230, 7
    %v232 = vsub.s32 5, %v231
    %v233 = vrot.slane %v206, %v232
    %v234 = vlaneseq
    %v235 = vshrl.u32 %v234, 7
    %v236 = vsub.s32 6, %v235
    %v237 = vrot.slane %v206, %v236
    %v238 = vlaneseq
    %v239 = vshrl.u32 %v238, 7
    %v240 = vsub.s32 7, %v239
    %v241 = vrot.slane %v206, %v240
    %v242 = vlaneseq
    %v243 = vshrl.u32 %v242, 7
    %v244 = vsub.s32 0, %v243
    %v245 = vrot.slane %v207, %v244
    %v246 = vlaneseq
    %v247 = vshrl.u32 %v246, 7
    %v248 = vsub.s32 1, %v247
    %v249 = vrot.slane %v207, %v248
    %v250 = vlaneseq
    %v251 = vshrl.u32 %v250, 7
    %v252 = vsub.s32 2, %v251
    %v253 = vrot.slane %v207, %v252
    %v254 = vlaneseq
    %v255 = vshrl.u32 %v254, 7
    %v256 = vsub.s32 3, %v255
    %v257 = vrot.slane %v207, %v256
    %v258 = vlaneseq
    %v259 = vshrl.u32 %v258, 7
    %v260 = vsub.s32 4, %v259
    %v261 = vrot.slane %v207, %v260
    %v262 = vlaneseq
    %v263 = vshrl.u32 %v262, 7
    %v264 = vsub.s32 5, %v263
    %v265 = vrot.slane %v207, %v264
    %v266 = vlaneseq
    %v267 = vshrl.u32 %v266, 7
    %v268 = vsub.s32 6, %v267
    %v269 = vrot.slane %v207, %v268
    %vm285 = vcmask 392192
    %v287 = vsel %vm285, %v115, 0
    %289 = vmatprep.subr.mxu0 %v117
    %290 = vmatpush1.msra.mxu0 %v116
    %291 = vmatprep.subr.mxu0 %v132
    %292 = vmatpush1.msra.mxu0 %v131
    %293 = vmatprep.subr.mxu0 %v147
    %294 = vmatpush1.msra.mxu0 %v146
    %295 = vmatprep.subr.mxu0 %v162
    %296 = vmatpush1.msra.mxu0 %v161
    %297 = vmatprep.subr.mxu0 %v177
    %298 = vmatpush1.msra.mxu0 %v176
    %299 = vmatprep.subr.mxu0 %v192
    %300 = vmatpush1.msra.mxu0 %v191
    %301 = vmatprep.subr.mxu0 0.0
    %302 = vmatpush1.msra.mxu0 0.0
    %303 = vmatprep.subr.mxu0 0.0
    %304 = vmatpush1.msra.mxu0 0.0
    %305 = vmatprep.subr.mxu0 0.0
    %306 = vmatpush1.msra.mxu0 0.0
    %307 = vmatprep.subr.mxu0 0.0
    %308 = vmatpush1.msra.mxu0 0.0
    %309 = vmatprep.subr.mxu0 0.0
    %310 = vmatpush1.msra.mxu0 0.0
    %311 = vmatprep.subr.mxu0 0.0
    %312 = vmatpush1.msra.mxu0 0.0
    %313 = vmatprep.subr.mxu0 0.0
    %314 = vmatpush1.msra.mxu0 0.0
    %315 = vmatprep.subr.mxu0 0.0
    %316 = vmatpush1.msra.mxu0 0.0
    %317 = vmatprep.subr.mxu0 0.0
    %318 = vmatpush1.msra.mxu0 0.0
    %319 = vmatprep.subr.mxu0 0.0
    %320 = vmatpush1.msra.mxu0 0.0
    %321 = vmatprep.subr.mxu0 0.0
    %322 = vmatpush1.msra.mxu0 0.0
    %323 = vmatprep.subr.mxu0 0.0
    %324 = vmatpush1.msra.mxu0 0.0
    %325 = vmatprep.subr.mxu0 0.0
    %326 = vmatpush1.msra.mxu0 0.0
    %327 = vmatprep.subr.mxu0 0.0
    %328 = vmatpush1.msra.mxu0 0.0
    %329 = vmatprep.subr.mxu0 0.0
    %330 = vmatpush1.msra.mxu0 0.0
    %331 = vmatprep.subr.mxu0 0.0
    %332 = vmatpush1.msra.mxu0 0.0
    %333 = vmatprep.subr.mxu0 0.0
    %334 = vmatpush1.msra.mxu0 0.0
    %335 = vmatprep.subr.mxu0 0.0
    %336 = vmatpush1.msra.mxu0 0.0
    %337 = vmatprep.subr.mxu0 0.0
    %338 = vmatpush1.msra.mxu0 0.0
    %339 = vmatprep.subr.mxu0 0.0
    %340 = vmatpush1.msra.mxu0 0.0
    %341 = vmatprep.subr.mxu0 0.0
    %342 = vmatpush1.msra.mxu0 0.0
    %343 = vmatprep.subr.mxu0 0.0
    %344 = vmatpush1.msra.mxu0 0.0
    %345 = vmatprep.subr.mxu0 0.0
    %346 = vmatpush1.msra.mxu0 0.0
    %347 = vmatprep.subr.mxu0 0.0
    %348 = vmatpush1.msra.mxu0 0.0
    %349 = vmatprep.subr.mxu0 0.0
    %350 = vmatpush1.msra.mxu0 0.0
    %351 = vmatprep.subr.mxu0 0.0
    %352 = vmatpush1.msra.mxu0 0.0
    %353 = vmatprep.mubr.f32.mxu0 0.0
    %354 = vmatmul.mubr.f32.gmra.mrb[0].mxu0 %v287
    %v355 = vpop.f32.mrb[0].mxu0
    %v356 = vadd.f32 %v213, %v355
    %v357 = vpop.f32.mrb[0].mxu0
    %v358 = vadd.f32 %v217, %v357
    %359 = vdwg.mxu0
    %360 = vmatprep.subr.mxu0 %v119
    %361 = vmatpush1.msra.mxu0 %v118
    %362 = vmatprep.subr.mxu0 %v134
    %363 = vmatpush1.msra.mxu0 %v133
    %364 = vmatprep.subr.mxu0 %v149
    %365 = vmatpush1.msra.mxu0 %v148
    %366 = vmatprep.subr.mxu0 %v164
    %367 = vmatpush1.msra.mxu0 %v163
    %368 = vmatprep.subr.mxu0 %v179
    %369 = vmatpush1.msra.mxu0 %v178
    %370 = vmatprep.subr.mxu0 %v194
    %371 = vmatpush1.msra.mxu0 %v193
    %372 = vmatprep.subr.mxu0 0.0
    %373 = vmatpush1.msra.mxu0 0.0
    %374 = vmatprep.subr.mxu0 0.0
    %375 = vmatpush1.msra.mxu0 0.0
    %376 = vmatprep.subr.mxu0 0.0
    %377 = vmatpush1.msra.mxu0 0.0
    %378 = vmatprep.subr.mxu0 0.0
    %379 = vmatpush1.msra.mxu0 0.0
    %380 = vmatprep.subr.mxu0 0.0
    %381 = vmatpush1.msra.mxu0 0.0
    %382 = vmatprep.subr.mxu0 0.0
    %383 = vmatpush1.msra.mxu0 0.0
    %384 = vmatprep.subr.mxu0 0.0
    %385 = vmatpush1.msra.mxu0 0.0
    %386 = vmatprep.subr.mxu0 0.0
    %387 = vmatpush1.msra.mxu0 0.0
    %388 = vmatprep.subr.mxu0 0.0
    %389 = vmatpush1.msra.mxu0 0.0
    %390 = vmatprep.subr.mxu0 0.0
    %391 = vmatpush1.msra.mxu0 0.0
    %392 = vmatprep.subr.mxu0 0.0
    %393 = vmatpush1.msra.mxu0 0.0
    %394 = vmatprep.subr.mxu0 0.0
    %395 = vmatpush1.msra.mxu0 0.0
    %396 = vmatprep.subr.mxu0 0.0
    %397 = vmatpush1.msra.mxu0 0.0
    %398 = vmatprep.subr.mxu0 0.0
    %399 = vmatpush1.msra.mxu0 0.0
    %400 = vmatprep.subr.mxu0 0.0
    %401 = vmatpush1.msra.mxu0 0.0
    %402 = vmatprep.subr.mxu0 0.0
    %403 = vmatpush1.msra.mxu0 0.0
    %404 = vmatprep.subr.mxu0 0.0
    %405 = vmatpush1.msra.mxu0 0.0
    %406 = vmatprep.subr.mxu0 0.0
    %407 = vmatpush1.msra.mxu0 0.0
    %408 = vmatprep.subr.mxu0 0.0
    %409 = vmatpush1.msra.mxu0 0.0
    %410 = vmatprep.subr.mxu0 0.0
    %411 = vmatpush1.msra.mxu0 0.0
    %412 = vmatprep.subr.mxu0 0.0
    %413 = vmatpush1.msra.mxu0 0.0
    %414 = vmatprep.subr.mxu0 0.0
    %415 = vmatpush1.msra.mxu0 0.0
    %416 = vmatprep.subr.mxu0 0.0
    %417 = vmatpush1.msra.mxu0 0.0
    %418 = vmatprep.subr.mxu0 0.0
    %419 = vmatpush1.msra.mxu0 0.0
    %420 = vmatprep.subr.mxu0 0.0
    %421 = vmatpush1.msra.mxu0 0.0
    %422 = vmatprep.subr.mxu0 0.0
    %423 = vmatpush1.msra.mxu0 0.0
    %424 = vmatprep.mubr.f32.mxu0 0.0
    %425 = vmatmul.mubr.f32.gmra.mrb[0].mxu0 %v287
    %v426 = vpop.f32.mrb[0].mxu0
    %v427 = vadd.f32 %v221, %v426
    %v428 = vpop.f32.mrb[0].mxu0
    %v429 = vadd.f32 %v225, %v428
    %430 = vdwg.mxu0
    %431 = vmatprep.subr.mxu0 %v121
    %432 = vmatpush1.msra.mxu0 %v120
    %433 = vmatprep.subr.mxu0 %v136
    %434 = vmatpush1.msra.mxu0 %v135
    %435 = vmatprep.subr.mxu0 %v151
    %436 = vmatpush1.msra.mxu0 %v150
    %437 = vmatprep.subr.mxu0 %v166
    %438 = vmatpush1.msra.mxu0 %v165
    %439 = vmatprep.subr.mxu0 %v181
    %440 = vmatpush1.msra.mxu0 %v180
    %441 = vmatprep.subr.mxu0 %v196
    %442 = vmatpush1.msra.mxu0 %v195
    %443 = vmatprep.subr.mxu0 0.0
    %444 = vmatpush1.msra.mxu0 0.0
    %445 = vmatprep.subr.mxu0 0.0
    %446 = vmatpush1.msra.mxu0 0.0
    %447 = vmatprep.subr.mxu0 0.0
    %448 = vmatpush1.msra.mxu0 0.0
    %449 = vmatprep.subr.mxu0 0.0
    %450 = vmatpush1.msra.mxu0 0.0
    %451 = vmatprep.subr.mxu0 0.0
    %452 = vmatpush1.msra.mxu0 0.0
    %453 = vmatprep.subr.mxu0 0.0
    %454 = vmatpush1.msra.mxu0 0.0
    %455 = vmatprep.subr.mxu0 0.0
    %456 = vmatpush1.msra.mxu0 0.0
    %457 = vmatprep.subr.mxu0 0.0
    %458 = vmatpush1.msra.mxu0 0.0
    %459 = vmatprep.subr.mxu0 0.0
    %460 = vmatpush1.msra.mxu0 0.0
    %461 = vmatprep.subr.mxu0 0.0
    %462 = vmatpush1.msra.mxu0 0.0
    %463 = vmatprep.subr.mxu0 0.0
    %464 = vmatpush1.msra.mxu0 0.0
    %465 = vmatprep.subr.mxu0 0.0
    %466 = vmatpush1.msra.mxu0 0.0
    %467 = vmatprep.subr.mxu0 0.0
    %468 = vmatpush1.msra.mxu0 0.0
    %469 = vmatprep.subr.mxu0 0.0
    %470 = vmatpush1.msra.mxu0 0.0
    %471 = vmatprep.subr.mxu0 0.0
    %472 = vmatpush1.msra.mxu0 0.0
    %473 = vmatprep.subr.mxu0 0.0
    %474 = vmatpush1.msra.mxu0 0.0
    %475 = vmatprep.subr.mxu0 0.0
    %476 = vmatpush1.msra.mxu0 0.0
    %477 = vmatprep.subr.mxu0 0.0
    %478 = vmatpush1.msra.mxu0 0.0
    %479 = vmatprep.subr.mxu0 0.0
    %480 = vmatpush1.msra.mxu0 0.0
    %481 = vmatprep.subr.mxu0 0.0
    %482 = vmatpush1.msra.mxu0 0.0
    %483 = vmatprep.subr.mxu0 0.0
    %484 = vmatpush1.msra.mxu0 0.0
    %485 = vmatprep.subr.mxu0 0.0
    %486 = vmatpush1.msra.mxu0 0.0
    %487 = vmatprep.subr.mxu0 0.0
    %488 = vmatpush1.msra.mxu0 0.0
    %489 = vmatprep.subr.mxu0 0.0
    %490 = vmatpush1.msra.mxu0 0.0
    %491 = vmatprep.subr.mxu0 0.0
    %492 = vmatpush1.msra.mxu0 0.0
    %493 = vmatprep.subr.mxu0 0.0
    %494 = vmatpush1.msra.mxu0 0.0
    %495 = vmatprep.mubr.f32.mxu0 0.0
    %496 = vmatmul.mubr.f32.gmra.mrb[0].mxu0 %v287
    %v497 = vpop.f32.mrb[0].mxu0
    %v498 = vadd.f32 %v229, %v497
    %v499 = vpop.f32.mrb[0].mxu0
    %v500 = vadd.f32 %v233, %v499
    %501 = vdwg.mxu0
    %502 = vmatprep.subr.mxu0 %v123
    %503 = vmatpush1.msra.mxu0 %v122
    %504 = vmatprep.subr.mxu0 %v138
    %505 = vmatpush1.msra.mxu0 %v137
    %506 = vmatprep.subr.mxu0 %v153
    %507 = vmatpush1.msra.mxu0 %v152
    %508 = vmatprep.subr.mxu0 %v168
    %509 = vmatpush1.msra.mxu0 %v167
    %510 = vmatprep.subr.mxu0 %v183
    %511 = vmatpush1.msra.mxu0 %v182
    %512 = vmatprep.subr.mxu0 %v198
    %513 = vmatpush1.msra.mxu0 %v197
    %514 = vmatprep.subr.mxu0 0.0
    %515 = vmatpush1.msra.mxu0 0.0
    %516 = vmatprep.subr.mxu0 0.0
    %517 = vmatpush1.msra.mxu0 0.0
    %518 = vmatprep.subr.mxu0 0.0
    %519 = vmatpush1.msra.mxu0 0.0
    %520 = vmatprep.subr.mxu0 0.0
    %521 = vmatpush1.msra.mxu0 0.0
    %522 = vmatprep.subr.mxu0 0.0
    %523 = vmatpush1.msra.mxu0 0.0
    %524 = vmatprep.subr.mxu0 0.0
    %525 = vmatpush1.msra.mxu0 0.0
    %526 = vmatprep.subr.mxu0 0.0
    %527 = vmatpush1.msra.mxu0 0.0
    %528 = vmatprep.subr.mxu0 0.0
    %529 = vmatpush1.msra.mxu0 0.0
    %530 = vmatprep.subr.mxu0 0.0
    %531 = vmatpush1.msra.mxu0 0.0
    %532 = vmatprep.subr.mxu0 0.0
    %533 = vmatpush1.msra.mxu0 0.0
    %534 = vmatprep.subr.mxu0 0.0
    %535 = vmatpush1.msra.mxu0 0.0
    %536 = vmatprep.subr.mxu0 0.0
    %537 = vmatpush1.msra.mxu0 0.0
    %538 = vmatprep.subr.mxu0 0.0
    %539 = vmatpush1.msra.mxu0 0.0
    %540 = vmatprep.subr.mxu0 0.0
    %541 = vmatpush1.msra.mxu0 0.0
    %542 = vmatprep.subr.mxu0 0.0
    %543 = vmatpush1.msra.mxu0 0.0
    %544 = vmatprep.subr.mxu0 0.0
    %545 = vmatpush1.msra.mxu0 0.0
    %546 = vmatprep.subr.mxu0 0.0
    %547 = vmatpush1.msra.mxu0 0.0
    %548 = vmatprep.subr.mxu0 0.0
    %549 = vmatpush1.msra.mxu0 0.0
    %550 = vmatprep.subr.mxu0 0.0
    %551 = vmatpush1.msra.mxu0 0.0
    %552 = vmatprep.subr.mxu0 0.0
    %553 = vmatpush1.msra.mxu0 0.0
    %554 = vmatprep.subr.mxu0 0.0
    %555 = vmatpush1.msra.mxu0 0.0
    %556 = vmatprep.subr.mxu0 0.0
    %557 = vmatpush1.msra.mxu0 0.0
    %558 = vmatprep.subr.mxu0 0.0
    %559 = vmatpush1.msra.mxu0 0.0
    %560 = vmatprep.subr.mxu0 0.0
    %561 = vmatpush1.msra.mxu0 0.0
    %562 = vmatprep.subr.mxu0 0.0
    %563 = vmatpush1.msra.mxu0 0.0
    %564 = vmatprep.subr.mxu0 0.0
    %565 = vmatpush1.msra.mxu0 0.0
    %566 = vmatprep.mubr.f32.mxu0 0.0
    %567 = vmatmul.mubr.f32.gmra.mrb[0].mxu0 %v287
    %v568 = vpop.f32.mrb[0].mxu0
    %v569 = vadd.f32 %v237, %v568
    %v570 = vpop.f32.mrb[0].mxu0
    %v571 = vadd.f32 %v241, %v570
    %572 = vdwg.mxu0
    %573 = vmatprep.subr.mxu0 %v125
    %574 = vmatpush1.msra.mxu0 %v124
    %575 = vmatprep.subr.mxu0 %v140
    %576 = vmatpush1.msra.mxu0 %v139
    %577 = vmatprep.subr.mxu0 %v155
    %578 = vmatpush1.msra.mxu0 %v154
    %579 = vmatprep.subr.mxu0 %v170
    %580 = vmatpush1.msra.mxu0 %v169
    %581 = vmatprep.subr.mxu0 %v185
    %582 = vmatpush1.msra.mxu0 %v184
    %583 = vmatprep.subr.mxu0 %v200
    %584 = vmatpush1.msra.mxu0 %v199
    %585 = vmatprep.subr.mxu0 0.0
    %586 = vmatpush1.msra.mxu0 0.0
    %587 = vmatprep.subr.mxu0 0.0
    %588 = vmatpush1.msra.mxu0 0.0
    %589 = vmatprep.subr.mxu0 0.0
    %590 = vmatpush1.msra.mxu0 0.0
    %591 = vmatprep.subr.mxu0 0.0
    %592 = vmatpush1.msra.mxu0 0.0
    %593 = vmatprep.subr.mxu0 0.0
    %594 = vmatpush1.msra.mxu0 0.0
    %595 = vmatprep.subr.mxu0 0.0
    %596 = vmatpush1.msra.mxu0 0.0
    %597 = vmatprep.subr.mxu0 0.0
    %598 = vmatpush1.msra.mxu0 0.0
    %599 = vmatprep.subr.mxu0 0.0
    %600 = vmatpush1.msra.mxu0 0.0
    %601 = vmatprep.subr.mxu0 0.0
    %602 = vmatpush1.msra.mxu0 0.0
    %603 = vmatprep.subr.mxu0 0.0
    %604 = vmatpush1.msra.mxu0 0.0
    %605 = vmatprep.subr.mxu0 0.0
    %606 = vmatpush1.msra.mxu0 0.0
    %607 = vmatprep.subr.mxu0 0.0
    %608 = vmatpush1.msra.mxu0 0.0
    %609 = vmatprep.subr.mxu0 0.0
    %610 = vmatpush1.msra.mxu0 0.0
    %611 = vmatprep.subr.mxu0 0.0
    %612 = vmatpush1.msra.mxu0 0.0
    %613 = vmatprep.subr.mxu0 0.0
    %614 = vmatpush1.msra.mxu0 0.0
    %615 = vmatprep.subr.mxu0 0.0
    %616 = vmatpush1.msra.mxu0 0.0
    %617 = vmatprep.subr.mxu0 0.0
    %618 = vmatpush1.msra.mxu0 0.0
    %619 = vmatprep.subr.mxu0 0.0
    %620 = vmatpush1.msra.mxu0 0.0
    %621 = vmatprep.subr.mxu0 0.0
    %622 = vmatpush1.msra.mxu0 0.0
    %623 = vmatprep.subr.mxu0 0.0
    %624 = vmatpush1.msra.mxu0 0.0
    %625 = vmatprep.subr.mxu0 0.0
    %626 = vmatpush1.msra.mxu0 0.0
    %627 = vmatprep.subr.mxu0 0.0
    %628 = vmatpush1.msra.mxu0 0.0
    %629 = vmatprep.subr.mxu0 0.0
    %630 = vmatpush1.msra.mxu0 0.0
    %631 = vmatprep.subr.mxu0 0.0
    %632 = vmatpush1.msra.mxu0 0.0
    %633 = vmatprep.subr.mxu0 0.0
    %634 = vmatpush1.msra.mxu0 0.0
    %635 = vmatprep.subr.mxu0 0.0
    %636 = vmatpush1.msra.mxu0 0.0
    %637 = vmatprep.mubr.f32.mxu0 0.0
    %638 = vmatmul.mubr.f32.gmra.mrb[0].mxu0 %v287
    %v639 = vpop.f32.mrb[0].mxu0
    %v640 = vadd.f32 %v245, %v639
    %v641 = vpop.f32.mrb[0].mxu0
    %v642 = vadd.f32 %v249, %v641
    %643 = vdwg.mxu0
    %644 = vmatprep.subr.mxu0 %v127
    %645 = vmatpush1.msra.mxu0 %v126
    %646 = vmatprep.subr.mxu0 %v142
    %647 = vmatpush1.msra.mxu0 %v141
    %648 = vmatprep.subr.mxu0 %v157
    %649 = vmatpush1.msra.mxu0 %v156
    %650 = vmatprep.subr.mxu0 %v172
    %651 = vmatpush1.msra.mxu0 %v171
    %652 = vmatprep.subr.mxu0 %v187
    %653 = vmatpush1.msra.mxu0 %v186
    %654 = vmatprep.subr.mxu0 %v202
    %655 = vmatpush1.msra.mxu0 %v201
    %656 = vmatprep.subr.mxu0 0.0
    %657 = vmatpush1.msra.mxu0 0.0
    %658 = vmatprep.subr.mxu0 0.0
    %659 = vmatpush1.msra.mxu0 0.0
    %660 = vmatprep.subr.mxu0 0.0
    %661 = vmatpush1.msra.mxu0 0.0
    %662 = vmatprep.subr.mxu0 0.0
    %663 = vmatpush1.msra.mxu0 0.0
    %664 = vmatprep.subr.mxu0 0.0
    %665 = vmatpush1.msra.mxu0 0.0
    %666 = vmatprep.subr.mxu0 0.0
    %667 = vmatpush1.msra.mxu0 0.0
    %668 = vmatprep.subr.mxu0 0.0
    %669 = vmatpush1.msra.mxu0 0.0
    %670 = vmatprep.subr.mxu0 0.0
    %671 = vmatpush1.msra.mxu0 0.0
    %672 = vmatprep.subr.mxu0 0.0
    %673 = vmatpush1.msra.mxu0 0.0
    %674 = vmatprep.subr.mxu0 0.0
    %675 = vmatpush1.msra.mxu0 0.0
    %676 = vmatprep.subr.mxu0 0.0
    %677 = vmatpush1.msra.mxu0 0.0
    %678 = vmatprep.subr.mxu0 0.0
    %679 = vmatpush1.msra.mxu0 0.0
    %680 = vmatprep.subr.mxu0 0.0
    %681 = vmatpush1.msra.mxu0 0.0
    %682 = vmatprep.subr.mxu0 0.0
    %683 = vmatpush1.msra.mxu0 0.0
    %684 = vmatprep.subr.mxu0 0.0
    %685 = vmatpush1.msra.mxu0 0.0
    %686 = vmatprep.subr.mxu0 0.0
    %687 = vmatpush1.msra.mxu0 0.0
    %688 = vmatprep.subr.mxu0 0.0
    %689 = vmatpush1.msra.mxu0 0.0
    %690 = vmatprep.subr.mxu0 0.0
    %691 = vmatpush1.msra.mxu0 0.0
    %692 = vmatprep.subr.mxu0 0.0
    %693 = vmatpush1.msra.mxu0 0.0
    %694 = vmatprep.subr.mxu0 0.0
    %695 = vmatpush1.msra.mxu0 0.0
    %696 = vmatprep.subr.mxu0 0.0
    %697 = vmatpush1.msra.mxu0 0.0
    %698 = vmatprep.subr.mxu0 0.0
    %699 = vmatpush1.msra.mxu0 0.0
    %700 = vmatprep.subr.mxu0 0.0
    %701 = vmatpush1.msra.mxu0 0.0
    %702 = vmatprep.subr.mxu0 0.0
    %703 = vmatpush1.msra.mxu0 0.0
    %704 = vmatprep.subr.mxu0 0.0
    %705 = vmatpush1.msra.mxu0 0.0
    %706 = vmatprep.subr.mxu0 0.0
    %707 = vmatpush1.msra.mxu0 0.0
    %708 = vmatprep.mubr.f32.mxu0 0.0
    %709 = vmatmul.mubr.f32.gmra.mrb[0].mxu0 %v287
    %v710 = vpop.f32.mrb[0].mxu0
    %v711 = vadd.f32 %v253, %v710
    %v712 = vpop.f32.mrb[0].mxu0
    %v713 = vadd.f32 %v257, %v712
    %714 = vdwg.mxu0
    %715 = vmatprep.subr.mxu0 %v129
    %716 = vmatpush1.msra.mxu0 %v128
    %717 = vmatprep.subr.mxu0 %v144
    %718 = vmatpush1.msra.mxu0 %v143
    %719 = vmatprep.subr.mxu0 %v159
    %720 = vmatpush1.msra.mxu0 %v158
    %721 = vmatprep.subr.mxu0 %v174
    %722 = vmatpush1.msra.mxu0 %v173
    %723 = vmatprep.subr.mxu0 %v189
    %724 = vmatpush1.msra.mxu0 %v188
    %725 = vmatprep.subr.mxu0 %v204
    %726 = vmatpush1.msra.mxu0 %v203
    %727 = vmatprep.subr.mxu0 0.0
    %728 = vmatpush1.msra.mxu0 0.0
    %729 = vmatprep.subr.mxu0 0.0
    %730 = vmatpush1.msra.mxu0 0.0
    %731 = vmatprep.subr.mxu0 0.0
    %732 = vmatpush1.msra.mxu0 0.0
    %733 = vmatprep.subr.mxu0 0.0
    %734 = vmatpush1.msra.mxu0 0.0
    %735 = vmatprep.subr.mxu0 0.0
    %736 = vmatpush1.msra.mxu0 0.0
    %737 = vmatprep.subr.mxu0 0.0
    %738 = vmatpush1.msra.mxu0 0.0
    %739 = vmatprep.subr.mxu0 0.0
    %740 = vmatpush1.msra.mxu0 0.0
    %741 = vmatprep.subr.mxu0 0.0
    %742 = vmatpush1.msra.mxu0 0.0
    %743 = vmatprep.subr.mxu0 0.0
    %744 = vmatpush1.msra.mxu0 0.0
    %745 = vmatprep.subr.mxu0 0.0
    %746 = vmatpush1.msra.mxu0 0.0
    %747 = vmatprep.subr.mxu0 0.0
    %748 = vmatpush1.msra.mxu0 0.0
    %749 = vmatprep.subr.mxu0 0.0
    %750 = vmatpush1.msra.mxu0 0.0
    %751 = vmatprep.subr.mxu0 0.0
    %752 = vmatpush1.msra.mxu0 0.0
    %753 = vmatprep.subr.mxu0 0.0
    %754 = vmatpush1.msra.mxu0 0.0
    %755 = vmatprep.subr.mxu0 0.0
    %756 = vmatpush1.msra.mxu0 0.0
    %757 = vmatprep.subr.mxu0 0.0
    %758 = vmatpush1.msra.mxu0 0.0
    %759 = vmatprep.subr.mxu0 0.0
    %760 = vmatpush1.msra.mxu0 0.0
    %761 = vmatprep.subr.mxu0 0.0
    %762 = vmatpush1.msra.mxu0 0.0
    %763 = vmatprep.subr.mxu0 0.0
    %764 = vmatpush1.msra.mxu0 0.0
    %765 = vmatprep.subr.mxu0 0.0
    %766 = vmatpush1.msra.mxu0 0.0
    %767 = vmatprep.subr.mxu0 0.0
    %768 = vmatpush1.msra.mxu0 0.0
    %769 = vmatprep.subr.mxu0 0.0
    %770 = vmatpush1.msra.mxu0 0.0
    %771 = vmatprep.subr.mxu0 0.0
    %772 = vmatpush1.msra.mxu0 0.0
    %773 = vmatprep.subr.mxu0 0.0
    %774 = vmatpush1.msra.mxu0 0.0
    %775 = vmatprep.subr.mxu0 0.0
    %776 = vmatpush1.msra.mxu0 0.0
    %777 = vmatprep.subr.mxu0 0.0
    %778 = vmatpush1.msra.mxu0 0.0
    %779 = vmatprep.mubr.f32.mxu0 0.0
    %780 = vmatmul.mubr.f32.gmra.mrb[0].mxu0 %v287
    %v781 = vpop.f32.mrb[0].mxu0
    %v782 = vadd.f32 %v261, %v781
    %v783 = vpop.f32.mrb[0].mxu0
    %v784 = vadd.f32 %v265, %v783
    %785 = vdwg.mxu0
    %786 = vmatprep.subr.mxu0 0.0
    %787 = vmatpush1.msra.mxu0 %v130
    %788 = vmatprep.subr.mxu0 0.0
    %789 = vmatpush1.msra.mxu0 %v145
    %790 = vmatprep.subr.mxu0 0.0
    %791 = vmatpush1.msra.mxu0 %v160
    %792 = vmatprep.subr.mxu0 0.0
    %793 = vmatpush1.msra.mxu0 %v175
    %794 = vmatprep.subr.mxu0 0.0
    %795 = vmatpush1.msra.mxu0 %v190
    %796 = vmatprep.subr.mxu0 0.0
    %797 = vmatpush1.msra.mxu0 %v205
    %798 = vmatprep.subr.mxu0 0.0
    %799 = vmatpush1.msra.mxu0 0.0
    %800 = vmatprep.subr.mxu0 0.0
    %801 = vmatpush1.msra.mxu0 0.0
    %802 = vmatprep.subr.mxu0 0.0
    %803 = vmatpush1.msra.mxu0 0.0
    %804 = vmatprep.subr.mxu0 0.0
    %805 = vmatpush1.msra.mxu0 0.0
    %806 = vmatprep.subr.mxu0 0.0
    %807 = vmatpush1.msra.mxu0 0.0
    %808 = vmatprep.subr.mxu0 0.0
    %809 = vmatpush1.msra.mxu0 0.0
    %810 = vmatprep.subr.mxu0 0.0
    %811 = vmatpush1.msra.mxu0 0.0
    %812 = vmatprep.subr.mxu0 0.0
    %813 = vmatpush1.msra.mxu0 0.0
    %814 = vmatprep.subr.mxu0 0.0
    %815 = vmatpush1.msra.mxu0 0.0
    %816 = vmatprep.subr.mxu0 0.0
    %817 = vmatpush1.msra.mxu0 0.0
    %818 = vmatprep.subr.mxu0 0.0
    %819 = vmatpush1.msra.mxu0 0.0
    %820 = vmatprep.subr.mxu0 0.0
    %821 = vmatpush1.msra.mxu0 0.0
    %822 = vmatprep.subr.mxu0 0.0
    %823 = vmatpush1.msra.mxu0 0.0
    %824 = vmatprep.subr.mxu0 0.0
    %825 = vmatpush1.msra.mxu0 0.0
    %826 = vmatprep.subr.mxu0 0.0
    %827 = vmatpush1.msra.mxu0 0.0
    %828 = vmatprep.subr.mxu0 0.0
    %829 = vmatpush1.msra.mxu0 0.0
    %830 = vmatprep.subr.mxu0 0.0
    %831 = vmatpush1.msra.mxu0 0.0
    %832 = vmatprep.subr.mxu0 0.0
    %833 = vmatpush1.msra.mxu0 0.0
    %834 = vmatprep.subr.mxu0 0.0
    %835 = vmatpush1.msra.mxu0 0.0
    %836 = vmatprep.subr.mxu0 0.0
    %837 = vmatpush1.msra.mxu0 0.0
    %838 = vmatprep.subr.mxu0 0.0
    %839 = vmatpush1.msra.mxu0 0.0
    %840 = vmatprep.subr.mxu0 0.0
    %841 = vmatpush1.msra.mxu0 0.0
    %842 = vmatprep.subr.mxu0 0.0
    %843 = vmatpush1.msra.mxu0 0.0
    %844 = vmatprep.subr.mxu0 0.0
    %845 = vmatpush1.msra.mxu0 0.0
    %846 = vmatprep.subr.mxu0 0.0
    %847 = vmatpush1.msra.mxu0 0.0
    %848 = vmatprep.subr.mxu0 0.0
    %849 = vmatpush1.msra.mxu0 0.0
    %850 = vmatprep.mubr.f32.mxu0 0.0
    %851 = vmatmul.mubr.f32.gmra.mrb[0].mxu0 %v287
    %v852 = vpop.f32.mrb[0].mxu0
    %v853 = vadd.f32 %v269, %v852
    %v854 = vpop.f32.mrb[0].mxu0
    %855 = vdwg.mxu0
    %v856 = vmax.f32 %v356, 0.0
    %v857 = vmax.f32 %v358, 0.0
    %v858 = vmax.f32 %v427, 0.0
    %v859 = vmax.f32 %v429, 0.0
    %v860 = vmax.f32 %v498, 0.0
    %v861 = vmax.f32 %v500, 0.0
    %v862 = vmax.f32 %v569, 0.0
    %v863 = vmax.f32 %v571, 0.0
    %v864 = vmax.f32 %v640, 0.0
    %v865 = vmax.f32 %v642, 0.0
    %v866 = vmax.f32 %v711, 0.0
    %v867 = vmax.f32 %v713, 0.0
    %v868 = vmax.f32 %v782, 0.0
    %v869 = vmax.f32 %v784, 0.0
    %v870 = vmax.f32 %v853, 0.0
    %871 = vst [vmem:[#allocation2] sm:$0xff] %v856
    %872 = vst [vmem:[#allocation2 + $0x8] sm:$0xff] %v857
    %873 = vst [vmem:[#allocation2 + $0x10] sm:$0xff] %v858
    %874 = vst [vmem:[#allocation2 + $0x18] sm:$0xff] %v859
    %875 = vst [vmem:[#allocation2 + $0x20] sm:$0xff] %v860
    %876 = vst [vmem:[#allocation2 + $0x28] sm:$0xff] %v861
    %877 = vst [vmem:[#allocation2 + $0x30] sm:$0xff] %v862
    %878 = vst [vmem:[#allocation2 + $0x38] sm:$0xff] %v863
    %879 = vst [vmem:[#allocation2 + $0x40] sm:$0xff] %v864
    %880 = vst [vmem:[#allocation2 + $0x48] sm:$0xff] %v865
    %881 = vst [vmem:[#allocation2 + $0x50] sm:$0xff] %v866
    %882 = vst [vmem:[#allocation2 + $0x58] sm:$0xff] %v867
    %883 = vst [vmem:[#allocation2 + $0x60] sm:$0xff] %v868
    %884 = vst [vmem:[#allocation2 + $0x68] sm:$0xff] %v869
    %885 = vst [vmem:[#allocation2 + $0x70] sm:$0xff] %v870
    %v886 = vld [vmem:[#allocation2] sm:$0xff]
    %v887 = vld [vmem:[#allocation2 + $0x8] sm:$0xff]
    %v888 = vld [vmem:[#allocation2 + $0x10] sm:$0xff]
    %v889 = vld [vmem:[#allocation2 + $0x18] sm:$0xff]
    %v890 = vld [vmem:[#allocation2 + $0x20] sm:$0xff]
    %v891 = vld [vmem:[#allocation2 + $0x28] sm:$0xff]
    %v892 = vld [vmem:[#allocation2 + $0x30] sm:$0xff]
    %v893 = vld [vmem:[#allocation2 + $0x38] sm:$0xff]
    %v894 = vld [vmem:[#allocation2 + $0x40] sm:$0xff]
    %v895 = vld [vmem:[#allocation2 + $0x48] sm:$0xff]
    %v896 = vld [vmem:[#allocation2 + $0x50] sm:$0xff]
    %v897 = vld [vmem:[#allocation2 + $0x58] sm:$0xff]
    %v898 = vld [vmem:[#allocation2 + $0x60] sm:$0xff]
    %v899 = vld [vmem:[#allocation2 + $0x68] sm:$0xff]
    %v900 = vld [vmem:[#allocation2 + $0x70] sm:$0xff]
    %v901 = vld [vmem:[#allocation9] sm:$0xff]
    %v902 = vld [vmem:[#allocation9 + $0x8] sm:$0xff]
    %v903 = vld [vmem:[#allocation9 + $0x10] sm:$0xff]
    %v904 = vld [vmem:[#allocation9 + $0x18] sm:$0xff]
    %v905 = vld [vmem:[#allocation9 + $0x20] sm:$0xff]
    %v906 = vld [vmem:[#allocation9 + $0x28] sm:$0xff]
    %v907 = vld [vmem:[#allocation9 + $0x30] sm:$0xff]
    %v908 = vld [vmem:[#allocation9 + $0x38] sm:$0xff]
    %v909 = vld [vmem:[#allocation9 + $0x40] sm:$0xff]
    %v910 = vld [vmem:[#allocation9 + $0x48] sm:$0xff]
    %v911 = vld [vmem:[#allocation9 + $0x50] sm:$0xff]
    %v912 = vld [vmem:[#allocation9 + $0x58] sm:$0xff]
    %v913 = vld [vmem:[#allocation9 + $0x60] sm:$0xff]
    %v914 = vld [vmem:[#allocation9 + $0x68] sm:$0xff]
    %v915 = vld [vmem:[#allocation9 + $0x70] sm:$0xff]
    %v916 = vld [vmem:[#allocation9 + $0x78] sm:$0xff]
    %v917 = vld [vmem:[#allocation9 + $0x80] sm:$0xff]
    %v918 = vld [vmem:[#allocation9 + $0x88] sm:$0xff]
    %v919 = vld [vmem:[#allocation9 + $0x90] sm:$0xff]
    %v920 = vld [vmem:[#allocation9 + $0x98] sm:$0xff]
    %v921 = vld [vmem:[#allocation9 + $0xa0] sm:$0xff]
    %v922 = vld [vmem:[#allocation9 + $0xa8] sm:$0xff]
    %v923 = vld [vmem:[#allocation9 + $0xb0] sm:$0xff]
    %v924 = vld [vmem:[#allocation9 + $0xb8] sm:$0xff]
    %v925 = vld [vmem:[#allocation9 + $0xc0] sm:$0xff]
    %v926 = vld [vmem:[#allocation9 + $0xc8] sm:$0xff]
    %v927 = vld [vmem:[#allocation9 + $0xd0] sm:$0xff]
    %v928 = vld [vmem:[#allocation9 + $0xd8] sm:$0xff]
    %v929 = vld [vmem:[#allocation9 + $0xe0] sm:$0xff]
    %v930 = vld [vmem:[#allocation9 + $0xe8] sm:$0xff]
    %v931 = vld [vmem:[#allocation9 + $0xf0] sm:$0xff]
    %v932 = vld [vmem:[#allocation9 + $0xf8] sm:$0xff]
    %v933 = vld [vmem:[#allocation9 + $0x100] sm:$0xff]
    %v934 = vld [vmem:[#allocation9 + $0x108] sm:$0xff]
    %v935 = vld [vmem:[#allocation9 + $0x110] sm:$0xff]
    %v936 = vld [vmem:[#allocation9 + $0x118] sm:$0xff]
    %v937 = vld [vmem:[#allocation9 + $0x120] sm:$0xff]
    %v938 = vld [vmem:[#allocation9 + $0x128] sm:$0xff]
    %v939 = vld [vmem:[#allocation9 + $0x130] sm:$0xff]
    %v940 = vld [vmem:[#allocation9 + $0x138] sm:$0xff]
    %v941 = vld [vmem:[#allocation9 + $0x140] sm:$0xff]
    %v942 = vld [vmem:[#allocation9 + $0x148] sm:$0xff]
    %v943 = vld [vmem:[#allocation9 + $0x150] sm:$0xff]
    %v944 = vld [vmem:[#allocation9 + $0x158] sm:$0xff]
    %v945 = vld [vmem:[#allocation9 + $0x160] sm:$0xff]
    %v946 = vld [vmem:[#allocation9 + $0x168] sm:$0xff]
    %v947 = vld [vmem:[#allocation9 + $0x170] sm:$0xff]
    %v948 = vld [vmem:[#allocation9 + $0x178] sm:$0xff]
    %v949 = vld [vmem:[#allocation9 + $0x180] sm:$0xff]
    %v950 = vld [vmem:[#allocation9 + $0x188] sm:$0xff]
    %v951 = vld [vmem:[#allocation9 + $0x190] sm:$0xff]
    %v952 = vld [vmem:[#allocation9 + $0x198] sm:$0xff]
    %v953 = vld [vmem:[#allocation9 + $0x1a0] sm:$0xff]
    %v954 = vld [vmem:[#allocation9 + $0x1a8] sm:$0xff]
    %v955 = vld [vmem:[#allocation9 + $0x1b0] sm:$0xff]
    %v956 = vld [vmem:[#allocation9 + $0x1b8] sm:$0xff]
    %v957 = vld [vmem:[#allocation9 + $0x1c0] sm:$0xff]
    %v958 = vld [vmem:[#allocation9 + $0x1c8] sm:$0xff]
    %v959 = vld [vmem:[#allocation9 + $0x1d0] sm:$0xff]
    %v960 = vld [vmem:[#allocation9 + $0x1d8] sm:$0xff]
    %v961 = vld [vmem:[#allocation9 + $0x1e0] sm:$0xff]
    %v962 = vld [vmem:[#allocation9 + $0x1e8] sm:$0xff]
    %v963 = vld [vmem:[#allocation9 + $0x1f0] sm:$0xff]
    %v964 = vld [vmem:[#allocation9 + $0x1f8] sm:$0xff]
    %v965 = vld [vmem:[#allocation9 + $0x200] sm:$0xff]
    %v966 = vld [vmem:[#allocation9 + $0x208] sm:$0xff]
    %v967 = vld [vmem:[#allocation9 + $0x210] sm:$0xff]
    %v968 = vld [vmem:[#allocation9 + $0x218] sm:$0xff]
    %v969 = vld [vmem:[#allocation9 + $0x220] sm:$0xff]
    %v970 = vld [vmem:[#allocation9 + $0x228] sm:$0xff]
    %v971 = vld [vmem:[#allocation9 + $0x230] sm:$0xff]
    %v972 = vld [vmem:[#allocation9 + $0x238] sm:$0xff]
    %v973 = vld [vmem:[#allocation9 + $0x240] sm:$0xff]
    %v974 = vld [vmem:[#allocation9 + $0x248] sm:$0xff]
    %v975 = vld [vmem:[#allocation9 + $0x250] sm:$0xff]
    %v976 = vld [vmem:[#allocation9 + $0x258] sm:$0xff]
    %v977 = vld [vmem:[#allocation9 + $0x260] sm:$0xff]
    %v978 = vld [vmem:[#allocation9 + $0x268] sm:$0xff]
    %v979 = vld [vmem:[#allocation9 + $0x270] sm:$0xff]
    %v980 = vld [vmem:[#allocation9 + $0x278] sm:$0xff]
    %v981 = vld [vmem:[#allocation9 + $0x280] sm:$0xff]
    %v982 = vld [vmem:[#allocation9 + $0x288] sm:$0xff]
    %v983 = vld [vmem:[#allocation9 + $0x290] sm:$0xff]
    %v984 = vld [vmem:[#allocation9 + $0x298] sm:$0xff]
    %v985 = vld [vmem:[#allocation9 + $0x2a0] sm:$0xff]
    %v986 = vld [vmem:[#allocation9 + $0x2a8] sm:$0xff]
    %v987 = vld [vmem:[#allocation9 + $0x2b0] sm:$0xff]
    %v988 = vld [vmem:[#allocation9 + $0x2b8] sm:$0xff]
    %v989 = vld [vmem:[#allocation9 + $0x2c0] sm:$0xff]
    %v990 = vld [vmem:[#allocation9 + $0x2c8] sm:$0xff]
    %v991 = vld [vmem:[#allocation9 + $0x2d0] sm:$0xff]
    %v992 = vld [vmem:[#allocation9 + $0x2d8] sm:$0xff]
    %v993 = vld [vmem:[#allocation9 + $0x2e0] sm:$0xff]
    %v994 = vld [vmem:[#allocation9 + $0x2e8] sm:$0xff]
    %v995 = vld [vmem:[#allocation9 + $0x2f0] sm:$0xff]
    %v996 = vld [vmem:[#allocation9 + $0x2f8] sm:$0xff]
    %v997 = vld [vmem:[#allocation9 + $0x300] sm:$0xff]
    %v998 = vld [vmem:[#allocation9 + $0x308] sm:$0xff]
    %v999 = vld [vmem:[#allocation9 + $0x310] sm:$0xff]
    %v1000 = vld [vmem:[#allocation9 + $0x318] sm:$0xff]
    %v1001 = vld [vmem:[#allocation9 + $0x320] sm:$0xff]
    %v1002 = vld [vmem:[#allocation9 + $0x328] sm:$0xff]
    %v1003 = vld [vmem:[#allocation9 + $0x330] sm:$0xff]
    %v1004 = vld [vmem:[#allocation9 + $0x338] sm:$0xff]
    %v1005 = vld [vmem:[#allocation9 + $0x340] sm:$0xff]
    %v1006 = vld [vmem:[#allocation9 + $0x348] sm:$0xff]
    %v1007 = vld [vmem:[#allocation9 + $0x350] sm:$0xff]
    %v1008 = vld [vmem:[#allocation9 + $0x358] sm:$0xff]
    %v1009 = vld [vmem:[#allocation9 + $0x360] sm:$0xff]
    %v1010 = vld [vmem:[#allocation9 + $0x368] sm:$0xff]
    %v1011 = vld [vmem:[#allocation9 + $0x370] sm:$0xff]
    %v1012 = vld [vmem:[#allocation9 + $0x378] sm:$0xff]
    %v1013 = vld [vmem:[#allocation9 + $0x380] sm:$0xff]
    %v1014 = vld [vmem:[#allocation9 + $0x388] sm:$0xff]
    %v1015 = vld [vmem:[#allocation9 + $0x390] sm:$0xff]
    %v1016 = vld [vmem:[#allocation9 + $0x398] sm:$0xff]
    %v1017 = vld [vmem:[#allocation9 + $0x3a0] sm:$0xff]
    %v1018 = vld [vmem:[#allocation9 + $0x3a8] sm:$0xff]
    %v1019 = vld [vmem:[#allocation9 + $0x3b0] sm:$0xff]
    %v1020 = vld [vmem:[#allocation9 + $0x3b8] sm:$0xff]
    %v1021 = vld [vmem:[#allocation9 + $0x3c0] sm:$0xff]
    %v1022 = vld [vmem:[#allocation9 + $0x3c8] sm:$0xff]
    %v1023 = vld [vmem:[#allocation9 + $0x3d0] sm:$0xff]
    %v1024 = vld [vmem:[#allocation9 + $0x3d8] sm:$0xff]
    %v1025 = vld [vmem:[#allocation9 + $0x3e0] sm:$0xff]
    %v1026 = vld [vmem:[#allocation9 + $0x3e8] sm:$0xff]
    %v1027 = vld [vmem:[#allocation9 + $0x3f0] sm:$0xff]
    %v1028 = vld [vmem:[#allocation9 + $0x3f8] sm:$0xff]
    %v1029 = vld [vmem:[#allocation9 + $0x400] sm:$0xff]
    %v1030 = vld [vmem:[#allocation9 + $0x408] sm:$0xff]
    %v1031 = vld [vmem:[#allocation9 + $0x410] sm:$0xff]
    %v1032 = vld [vmem:[#allocation9 + $0x418] sm:$0xff]
    %v1033 = vld [vmem:[#allocation9 + $0x420] sm:$0xff]
    %v1034 = vld [vmem:[#allocation9 + $0x428] sm:$0xff]
    %v1035 = vld [vmem:[#allocation9 + $0x430] sm:$0xff]
    %v1036 = vld [vmem:[#allocation9 + $0x438] sm:$0xff]
    %v1037 = vld [vmem:[#allocation9 + $0x440] sm:$0xff]
    %v1038 = vld [vmem:[#allocation9 + $0x448] sm:$0xff]
    %v1039 = vld [vmem:[#allocation9 + $0x450] sm:$0xff]
    %v1040 = vld [vmem:[#allocation9 + $0x458] sm:$0xff]
    %v1041 = vld [vmem:[#allocation9 + $0x460] sm:$0xff]
    %v1042 = vld [vmem:[#allocation9 + $0x468] sm:$0xff]
    %v1043 = vld [vmem:[#allocation9 + $0x470] sm:$0xff]
    %v1044 = vld [vmem:[#allocation9 + $0x478] sm:$0xff]
    %v1045 = vld [vmem:[#allocation9 + $0x480] sm:$0xff]
    %v1046 = vld [vmem:[#allocation9 + $0x488] sm:$0xff]
    %v1047 = vld [vmem:[#allocation9 + $0x490] sm:$0xff]
    %v1048 = vld [vmem:[#allocation9 + $0x498] sm:$0xff]
    %v1049 = vld [vmem:[#allocation9 + $0x4a0] sm:$0xff]
    %v1050 = vld [vmem:[#allocation9 + $0x4a8] sm:$0xff]
    %v1051 = vld [vmem:[#allocation9 + $0x4b0] sm:$0xff]
    %v1052 = vld [vmem:[#allocation9 + $0x4b8] sm:$0xff]
    %v1053 = vld [vmem:[#allocation9 + $0x4c0] sm:$0xff]
    %v1054 = vld [vmem:[#allocation9 + $0x4c8] sm:$0xff]
    %v1055 = vld [vmem:[#allocation9 + $0x4d0] sm:$0xff]
    %v1056 = vld [vmem:[#allocation9 + $0x4d8] sm:$0xff]
    %v1057 = vld [vmem:[#allocation9 + $0x4e0] sm:$0xff]
    %v1058 = vld [vmem:[#allocation9 + $0x4e8] sm:$0xff]
    %v1059 = vld [vmem:[#allocation9 + $0x4f0] sm:$0xff]
    %v1060 = vld [vmem:[#allocation9 + $0x4f8] sm:$0xff]
    %v1061 = vld [vmem:[#allocation9 + $0x500] sm:$0xff]
    %v1062 = vld [vmem:[#allocation9 + $0x508] sm:$0xff]
    %v1063 = vld [vmem:[#allocation9 + $0x510] sm:$0xff]
    %v1064 = vld [vmem:[#allocation9 + $0x518] sm:$0xff]
    %v1065 = vld [vmem:[#allocation9 + $0x520] sm:$0xff]
    %v1066 = vld [vmem:[#allocation9 + $0x528] sm:$0xff]
    %v1067 = vld [vmem:[#allocation9 + $0x530] sm:$0xff]
    %v1068 = vld [vmem:[#allocation9 + $0x538] sm:$0xff]
    %v1069 = vld [vmem:[#allocation9 + $0x540] sm:$0xff]
    %v1070 = vld [vmem:[#allocation9 + $0x548] sm:$0xff]
    %v1071 = vld [vmem:[#allocation9 + $0x550] sm:$0xff]
    %v1072 = vld [vmem:[#allocation9 + $0x558] sm:$0xff]
    %v1073 = vld [vmem:[#allocation9 + $0x560] sm:$0xff]
    %v1074 = vld [vmem:[#allocation9 + $0x568] sm:$0xff]
    %v1075 = vld [vmem:[#allocation9 + $0x570] sm:$0xff]
    %v1076 = vld [vmem:[#allocation9 + $0x578] sm:$0xff]
    %v1077 = vld [vmem:[#allocation9 + $0x580] sm:$0xff]
    %v1078 = vld [vmem:[#allocation9 + $0x588] sm:$0xff]
    %v1079 = vld [vmem:[#allocation9 + $0x590] sm:$0xff]
    %v1080 = vld [vmem:[#allocation9 + $0x598] sm:$0xff]
    %v1081 = vld [vmem:[#allocation9 + $0x5a0] sm:$0xff]
    %v1082 = vld [vmem:[#allocation9 + $0x5a8] sm:$0xff]
    %v1083 = vld [vmem:[#allocation9 + $0x5b0] sm:$0xff]
    %v1084 = vld [vmem:[#allocation9 + $0x5b8] sm:$0xff]
    %v1085 = vld [vmem:[#allocation9 + $0x5c0] sm:$0xff]
    %v1086 = vld [vmem:[#allocation9 + $0x5c8] sm:$0xff]
    %v1087 = vld [vmem:[#allocation9 + $0x5d0] sm:$0xff]
    %v1088 = vld [vmem:[#allocation9 + $0x5d8] sm:$0xff]
    %v1089 = vld [vmem:[#allocation9 + $0x5e0] sm:$0xff]
    %v1090 = vld [vmem:[#allocation9 + $0x5e8] sm:$0xff]
    %v1091 = vld [vmem:[#allocation9 + $0x5f0] sm:$0xff]
    %v1092 = vld [vmem:[#allocation9 + $0x5f8] sm:$0xff]
    %v1093 = vld [vmem:[#allocation9 + $0x600] sm:$0xff]
    %v1094 = vld [vmem:[#allocation9 + $0x608] sm:$0xff]
    %v1095 = vld [vmem:[#allocation9 + $0x610] sm:$0xff]
    %v1096 = vld [vmem:[#allocation9 + $0x618] sm:$0xff]
    %v1097 = vld [vmem:[#allocation9 + $0x620] sm:$0xff]
    %v1098 = vld [vmem:[#allocation9 + $0x628] sm:$0xff]
    %v1099 = vld [vmem:[#allocation9 + $0x630] sm:$0xff]
    %v1100 = vld [vmem:[#allocation9 + $0x638] sm:$0xff]
    %v1101 = vld [vmem:[#allocation9 + $0x640] sm:$0xff]
    %v1102 = vld [vmem:[#allocation9 + $0x648] sm:$0xff]
    %v1103 = vld [vmem:[#allocation9 + $0x650] sm:$0xff]
    %v1104 = vld [vmem:[#allocation9 + $0x658] sm:$0xff]
    %v1105 = vld [vmem:[#allocation9 + $0x660] sm:$0xff]
    %v1106 = vld [vmem:[#allocation9 + $0x668] sm:$0xff]
    %v1107 = vld [vmem:[#allocation9 + $0x670] sm:$0xff]
    %v1108 = vld [vmem:[#allocation9 + $0x678] sm:$0xff]
    %v1109 = vld [vmem:[#allocation9 + $0x680] sm:$0xff]
    %v1110 = vld [vmem:[#allocation9 + $0x688] sm:$0xff]
    %v1111 = vld [vmem:[#allocation9 + $0x690] sm:$0xff]
    %v1112 = vld [vmem:[#allocation9 + $0x698] sm:$0xff]
    %v1113 = vld [vmem:[#allocation9 + $0x6a0] sm:$0xff]
    %v1114 = vld [vmem:[#allocation9 + $0x6a8] sm:$0xff]
    %v1115 = vld [vmem:[#allocation9 + $0x6b0] sm:$0xff]
    %v1116 = vld [vmem:[#allocation9 + $0x6b8] sm:$0xff]
    %v1117 = vld [vmem:[#allocation9 + $0x6c0] sm:$0xff]
    %v1118 = vld [vmem:[#allocation9 + $0x6c8] sm:$0xff]
    %v1119 = vld [vmem:[#allocation9 + $0x6d0] sm:$0xff]
    %v1120 = vld [vmem:[#allocation9 + $0x6d8] sm:$0xff]
    %v1121 = vld [vmem:[#allocation9 + $0x6e0] sm:$0xff]
    %v1122 = vld [vmem:[#allocation9 + $0x6e8] sm:$0xff]
    %v1123 = vld [vmem:[#allocation9 + $0x6f0] sm:$0xff]
    %v1124 = vld [vmem:[#allocation9 + $0x6f8] sm:$0xff]
    %v1125 = vld [vmem:[#allocation9 + $0x700] sm:$0xff]
    %v1126 = vld [vmem:[#allocation9 + $0x708] sm:$0xff]
    %v1127 = vld [vmem:[#allocation9 + $0x710] sm:$0xff]
    %v1128 = vld [vmem:[#allocation9 + $0x718] sm:$0xff]
    %v1129 = vld [vmem:[#allocation9 + $0x720] sm:$0xff]
    %v1130 = vld [vmem:[#allocation9 + $0x728] sm:$0xff]
    %v1131 = vld [vmem:[#allocation9 + $0x730] sm:$0xff]
    %v1132 = vld [vmem:[#allocation9 + $0x738] sm:$0xff]
    %v1133 = vld [vmem:[#allocation9 + $0x740] sm:$0xff]
    %v1134 = vld [vmem:[#allocation9 + $0x748] sm:$0xff]
    %v1135 = vld [vmem:[#allocation9 + $0x750] sm:$0xff]
    %v1136 = vld [vmem:[#allocation9 + $0x758] sm:$0xff]
    %v1137 = vld [vmem:[#allocation9 + $0x760] sm:$0xff]
    %v1138 = vld [vmem:[#allocation9 + $0x768] sm:$0xff]
    %v1139 = vld [vmem:[#allocation9 + $0x770] sm:$0xff]
    %v1140 = vld [vmem:[#allocation9 + $0x778] sm:$0xff]
    %v1141 = vld [vmem:[#allocation9 + $0x780] sm:$0xff]
    %v1142 = vld [vmem:[#allocation9 + $0x788] sm:$0xff]
    %v1143 = vld [vmem:[#allocation9 + $0x790] sm:$0xff]
    %v1144 = vld [vmem:[#allocation9 + $0x798] sm:$0xff]
    %v1145 = vld [vmem:[#allocation9 + $0x7a0] sm:$0xff]
    %v1146 = vld [vmem:[#allocation9 + $0x7a8] sm:$0xff]
    %v1147 = vld [vmem:[#allocation9 + $0x7b0] sm:$0xff]
    %v1148 = vld [vmem:[#allocation9 + $0x7b8] sm:$0xff]
    %v1149 = vld [vmem:[#allocation9 + $0x7c0] sm:$0xff]
    %v1150 = vld [vmem:[#allocation9 + $0x7c8] sm:$0xff]
    %v1151 = vld [vmem:[#allocation9 + $0x7d0] sm:$0xff]
    %v1152 = vld [vmem:[#allocation9 + $0x7d8] sm:$0xff]
    %v1153 = vld [vmem:[#allocation9 + $0x7e0] sm:$0xff]
    %v1154 = vld [vmem:[#allocation9 + $0x7e8] sm:$0xff]
    %v1155 = vld [vmem:[#allocation9 + $0x7f0] sm:$0xff]
    %v1156 = vld [vmem:[#allocation9 + $0x7f8] sm:$0xff]
    %v1157 = vld [vmem:[#allocation9 + $0x800] sm:$0xff]
    %v1158 = vld [vmem:[#allocation9 + $0x808] sm:$0xff]
    %v1159 = vld [vmem:[#allocation9 + $0x810] sm:$0xff]
    %v1160 = vld [vmem:[#allocation9 + $0x818] sm:$0xff]
    %v1161 = vld [vmem:[#allocation9 + $0x820] sm:$0xff]
    %v1162 = vld [vmem:[#allocation9 + $0x828] sm:$0xff]
    %v1163 = vld [vmem:[#allocation9 + $0x830] sm:$0xff]
    %v1164 = vld [vmem:[#allocation9 + $0x838] sm:$0xff]
    %v1165 = vld [vmem:[#allocation9 + $0x840] sm:$0xff]
    %v1166 = vld [vmem:[#allocation9 + $0x848] sm:$0xff]
    %v1167 = vld [vmem:[#allocation9 + $0x850] sm:$0xff]
    %v1168 = vld [vmem:[#allocation9 + $0x858] sm:$0xff]
    %v1169 = vld [vmem:[#allocation9 + $0x860] sm:$0xff]
    %v1170 = vld [vmem:[#allocation9 + $0x868] sm:$0xff]
    %v1171 = vld [vmem:[#allocation9 + $0x870] sm:$0xff]
    %v1172 = vld [vmem:[#allocation9 + $0x878] sm:$0xff]
    %v1173 = vld [vmem:[#allocation9 + $0x880] sm:$0xff]
    %v1174 = vld [vmem:[#allocation9 + $0x888] sm:$0xff]
    %v1175 = vld [vmem:[#allocation9 + $0x890] sm:$0xff]
    %v1176 = vld [vmem:[#allocation9 + $0x898] sm:$0xff]
    %v1177 = vld [vmem:[#allocation9 + $0x8a0] sm:$0xff]
    %v1178 = vld [vmem:[#allocation9 + $0x8a8] sm:$0xff]
    %v1179 = vld [vmem:[#allocation9 + $0x8b0] sm:$0xff]
    %v1180 = vld [vmem:[#allocation9 + $0x8b8] sm:$0xff]
    %v1181 = vld [vmem:[#allocation9 + $0x8c0] sm:$0xff]
    %v1182 = vld [vmem:[#allocation9 + $0x8c8] sm:$0xff]
    %v1183 = vld [vmem:[#allocation9 + $0x8d0] sm:$0xff]
    %v1184 = vld [vmem:[#allocation9 + $0x8d8] sm:$0xff]
    %v1185 = vld [vmem:[#allocation9 + $0x8e0] sm:$0xff]
    %v1186 = vld [vmem:[#allocation9 + $0x8e8] sm:$0xff]
    %v1187 = vld [vmem:[#allocation9 + $0x8f0] sm:$0xff]
    %v1188 = vld [vmem:[#allocation9 + $0x8f8] sm:$0xff]
    %v1189 = vld [vmem:[#allocation9 + $0x900] sm:$0xff]
    %v1190 = vld [vmem:[#allocation9 + $0x908] sm:$0xff]
    %v1191 = vld [vmem:[#allocation9 + $0x910] sm:$0xff]
    %v1192 = vld [vmem:[#allocation9 + $0x918] sm:$0xff]
    %v1193 = vld [vmem:[#allocation9 + $0x920] sm:$0xff]
    %v1194 = vld [vmem:[#allocation9 + $0x928] sm:$0xff]
    %v1195 = vld [vmem:[#allocation9 + $0x930] sm:$0xff]
    %v1196 = vld [vmem:[#allocation9 + $0x938] sm:$0xff]
    %v1197 = vld [vmem:[#allocation9 + $0x940] sm:$0xff]
    %v1198 = vld [vmem:[#allocation9 + $0x948] sm:$0xff]
    %v1199 = vld [vmem:[#allocation9 + $0x950] sm:$0xff]
    %v1200 = vld [vmem:[#allocation9 + $0x958] sm:$0xff]
    %v1201 = vld [vmem:[#allocation9 + $0x960] sm:$0xff]
    %v1202 = vld [vmem:[#allocation9 + $0x968] sm:$0xff]
    %v1203 = vld [vmem:[#allocation9 + $0x970] sm:$0xff]
    %v1204 = vld [vmem:[#allocation9 + $0x978] sm:$0xff]
    %v1205 = vld [vmem:[#allocation9 + $0x980] sm:$0xff]
    %v1206 = vld [vmem:[#allocation9 + $0x988] sm:$0xff]
    %v1207 = vld [vmem:[#allocation9 + $0x990] sm:$0xff]
    %v1208 = vld [vmem:[#allocation9 + $0x998] sm:$0xff]
    %v1209 = vld [vmem:[#allocation9 + $0x9a0] sm:$0xff]
    %v1210 = vld [vmem:[#allocation9 + $0x9a8] sm:$0xff]
    %v1211 = vld [vmem:[#allocation9 + $0x9b0] sm:$0xff]
    %v1212 = vld [vmem:[#allocation9 + $0x9b8] sm:$0xff]
    %v1213 = vld [vmem:[#allocation9 + $0x9c0] sm:$0xff]
    %v1214 = vld [vmem:[#allocation9 + $0x9c8] sm:$0xff]
    %v1215 = vld [vmem:[#allocation9 + $0x9d0] sm:$0xff]
    %v1216 = vld [vmem:[#allocation9 + $0x9d8] sm:$0xff]
    %v1217 = vld [vmem:[#allocation9 + $0x9e0] sm:$0xff]
    %v1218 = vld [vmem:[#allocation9 + $0x9e8] sm:$0xff]
    %v1219 = vld [vmem:[#allocation9 + $0x9f0] sm:$0xff]
    %v1220 = vld [vmem:[#allocation9 + $0x9f8] sm:$0xff]
    %v1221 = vld [vmem:[#allocation9 + $0xa00] sm:$0xff]
    %v1222 = vld [vmem:[#allocation9 + $0xa08] sm:$0xff]
    %v1223 = vld [vmem:[#allocation9 + $0xa10] sm:$0xff]
    %v1224 = vld [vmem:[#allocation9 + $0xa18] sm:$0xff]
    %v1225 = vld [vmem:[#allocation9 + $0xa20] sm:$0xff]
    %v1226 = vld [vmem:[#allocation9 + $0xa28] sm:$0xff]
    %v1227 = vld [vmem:[#allocation9 + $0xa30] sm:$0xff]
    %v1228 = vld [vmem:[#allocation9 + $0xa38] sm:$0xff]
    %v1229 = vld [vmem:[#allocation9 + $0xa40] sm:$0xff]
    %v1230 = vld [vmem:[#allocation9 + $0xa48] sm:$0xff]
    %v1231 = vld [vmem:[#allocation9 + $0xa50] sm:$0xff]
    %v1232 = vld [vmem:[#allocation9 + $0xa58] sm:$0xff]
    %v1233 = vld [vmem:[#allocation9 + $0xa60] sm:$0xff]
    %v1234 = vld [vmem:[#allocation9 + $0xa68] sm:$0xff]
    %v1235 = vld [vmem:[#allocation9 + $0xa70] sm:$0xff]
    %v1236 = vld [vmem:[#allocation9 + $0xa78] sm:$0xff]
    %v1237 = vld [vmem:[#allocation9 + $0xa80] sm:$0xff]
    %v1238 = vld [vmem:[#allocation9 + $0xa88] sm:$0xff]
    %v1239 = vld [vmem:[#allocation9 + $0xa90] sm:$0xff]
    %v1240 = vld [vmem:[#allocation9 + $0xa98] sm:$0xff]
    %v1241 = vld [vmem:[#allocation9 + $0xaa0] sm:$0xff]
    %v1242 = vld [vmem:[#allocation9 + $0xaa8] sm:$0xff]
    %v1243 = vld [vmem:[#allocation9 + $0xab0] sm:$0xff]
    %v1244 = vld [vmem:[#allocation9 + $0xab8] sm:$0xff]
    %v1245 = vld [vmem:[#allocation9 + $0xac0] sm:$0xff]
    %v1246 = vld [vmem:[#allocation9 + $0xac8] sm:$0xff]
    %v1247 = vld [vmem:[#allocation9 + $0xad0] sm:$0xff]
    %v1248 = vld [vmem:[#allocation9 + $0xad8] sm:$0xff]
    %v1249 = vld [vmem:[#allocation9 + $0xae0] sm:$0xff]
    %v1250 = vld [vmem:[#allocation9 + $0xae8] sm:$0xff]
    %v1251 = vld [vmem:[#allocation9 + $0xaf0] sm:$0xff]
    %v1252 = vld [vmem:[#allocation9 + $0xaf8] sm:$0xff]
    %v1253 = vld [vmem:[#allocation9 + $0xb00] sm:$0xff]
    %v1254 = vld [vmem:[#allocation9 + $0xb08] sm:$0xff]
    %v1255 = vld [vmem:[#allocation9 + $0xb10] sm:$0xff]
    %v1256 = vld [vmem:[#allocation9 + $0xb18] sm:$0xff]
    %v1257 = vld [vmem:[#allocation9 + $0xb20] sm:$0xff]
    %v1258 = vld [vmem:[#allocation9 + $0xb28] sm:$0xff]
    %v1259 = vld [vmem:[#allocation9 + $0xb30] sm:$0xff]
    %v1260 = vld [vmem:[#allocation9 + $0xb38] sm:$0xff]
    %v1261 = vld [vmem:[#allocation9 + $0xb40] sm:$0xff]
    %v1262 = vld [vmem:[#allocation9 + $0xb48] sm:$0xff]
    %v1263 = vld [vmem:[#allocation9 + $0xb50] sm:$0xff]
    %v1264 = vld [vmem:[#allocation9 + $0xb58] sm:$0xff]
    %v1265 = vld [vmem:[#allocation9 + $0xb60] sm:$0xff]
    %v1266 = vld [vmem:[#allocation9 + $0xb68] sm:$0xff]
    %v1267 = vld [vmem:[#allocation9 + $0xb70] sm:$0xff]
    %v1268 = vld [vmem:[#allocation9 + $0xb78] sm:$0xff]
    %v1269 = vld [vmem:[#allocation9 + $0xb80] sm:$0xff]
    %v1270 = vld [vmem:[#allocation9 + $0xb88] sm:$0xff]
    %v1271 = vld [vmem:[#allocation9 + $0xb90] sm:$0xff]
    %v1272 = vld [vmem:[#allocation9 + $0xb98] sm:$0xff]
    %v1273 = vld [vmem:[#allocation9 + $0xba0] sm:$0xff]
    %v1274 = vld [vmem:[#allocation9 + $0xba8] sm:$0xff]
    %v1275 = vld [vmem:[#allocation9 + $0xbb0] sm:$0xff]
    %v1276 = vld [vmem:[#allocation9 + $0xbb8] sm:$0xff]
    %v1277 = vld [vmem:[#allocation9 + $0xbc0] sm:$0xff]
    %v1278 = vld [vmem:[#allocation9 + $0xbc8] sm:$0xff]
    %v1279 = vld [vmem:[#allocation9 + $0xbd0] sm:$0xff]
    %v1280 = vld [vmem:[#allocation9 + $0xbd8] sm:$0xff]
    %v1281 = vld [vmem:[#allocation9 + $0xbe0] sm:$0xff]
    %v1282 = vld [vmem:[#allocation9 + $0xbe8] sm:$0xff]
    %v1283 = vld [vmem:[#allocation9 + $0xbf0] sm:$0xff]
    %v1284 = vld [vmem:[#allocation9 + $0xbf8] sm:$0xff]
    %v1285 = vld [vmem:[#allocation9 + $0xc00] sm:$0xff]
    %v1286 = vld [vmem:[#allocation9 + $0xc08] sm:$0xff]
    %v1287 = vld [vmem:[#allocation9 + $0xc10] sm:$0xff]
    %v1288 = vld [vmem:[#allocation9 + $0xc18] sm:$0xff]
    %v1289 = vld [vmem:[#allocation9 + $0xc20] sm:$0xff]
    %v1290 = vld [vmem:[#allocation9 + $0xc28] sm:$0xff]
    %v1291 = vld [vmem:[#allocation9 + $0xc30] sm:$0xff]
    %v1292 = vld [vmem:[#allocation9 + $0xc38] sm:$0xff]
    %v1293 = vld [vmem:[#allocation9 + $0xc40] sm:$0xff]
    %v1294 = vld [vmem:[#allocation9 + $0xc48] sm:$0xff]
    %v1295 = vld [vmem:[#allocation9 + $0xc50] sm:$0xff]
    %v1296 = vld [vmem:[#allocation9 + $0xc58] sm:$0xff]
    %v1297 = vld [vmem:[#allocation9 + $0xc60] sm:$0xff]
    %v1298 = vld [vmem:[#allocation9 + $0xc68] sm:$0xff]
    %v1299 = vld [vmem:[#allocation9 + $0xc70] sm:$0xff]
    %v1300 = vld [vmem:[#allocation9 + $0xc78] sm:$0xff]
    %v1301 = vld [vmem:[#allocation9 + $0xc80] sm:$0xff]
    %v1302 = vld [vmem:[#allocation9 + $0xc88] sm:$0xff]
    %v1303 = vld [vmem:[#allocation9 + $0xc90] sm:$0xff]
    %v1304 = vld [vmem:[#allocation9 + $0xc98] sm:$0xff]
    %v1305 = vld [vmem:[#allocation9 + $0xca0] sm:$0xff]
    %v1306 = vld [vmem:[#allocation9 + $0xca8] sm:$0xff]
    %v1307 = vld [vmem:[#allocation9 + $0xcb0] sm:$0xff]
    %v1308 = vld [vmem:[#allocation9 + $0xcb8] sm:$0xff]
    %v1309 = vld [vmem:[#allocation9 + $0xcc0] sm:$0xff]
    %v1310 = vld [vmem:[#allocation9 + $0xcc8] sm:$0xff]
    %v1311 = vld [vmem:[#allocation9 + $0xcd0] sm:$0xff]
    %v1312 = vld [vmem:[#allocation9 + $0xcd8] sm:$0xff]
    %v1313 = vld [vmem:[#allocation9 + $0xce0] sm:$0xff]
    %v1314 = vld [vmem:[#allocation9 + $0xce8] sm:$0xff]
    %v1315 = vld [vmem:[#allocation9 + $0xcf0] sm:$0xff]
    %v1316 = vld [vmem:[#allocation9 + $0xcf8] sm:$0xff]
    %v1317 = vld [vmem:[#allocation9 + $0xd00] sm:$0xff]
    %v1318 = vld [vmem:[#allocation9 + $0xd08] sm:$0xff]
    %v1319 = vld [vmem:[#allocation9 + $0xd10] sm:$0xff]
    %v1320 = vld [vmem:[#allocation9 + $0xd18] sm:$0xff]
    %v1321 = vld [vmem:[#allocation9 + $0xd20] sm:$0xff]
    %v1322 = vld [vmem:[#allocation9 + $0xd28] sm:$0xff]
    %v1323 = vld [vmem:[#allocation9 + $0xd30] sm:$0xff]
    %v1324 = vld [vmem:[#allocation9 + $0xd38] sm:$0xff]
    %v1325 = vld [vmem:[#allocation9 + $0xd40] sm:$0xff]
    %v1326 = vld [vmem:[#allocation9 + $0xd48] sm:$0xff]
    %v1327 = vld [vmem:[#allocation9 + $0xd50] sm:$0xff]
    %v1328 = vld [vmem:[#allocation9 + $0xd58] sm:$0xff]
    %v1329 = vld [vmem:[#allocation9 + $0xd60] sm:$0xff]
    %v1330 = vld [vmem:[#allocation9 + $0xd68] sm:$0xff]
    %v1331 = vld [vmem:[#allocation9 + $0xd70] sm:$0xff]
    %v1332 = vld [vmem:[#allocation9 + $0xd78] sm:$0xff]
    %v1333 = vld [vmem:[#allocation9 + $0xd80] sm:$0xff]
    %v1334 = vld [vmem:[#allocation9 + $0xd88] sm:$0xff]
    %v1335 = vld [vmem:[#allocation9 + $0xd90] sm:$0xff]
    %v1336 = vld [vmem:[#allocation9 + $0xd98] sm:$0xff]
    %v1337 = vld [vmem:[#allocation9 + $0xda0] sm:$0xff]
    %v1338 = vld [vmem:[#allocation9 + $0xda8] sm:$0xff]
    %v1339 = vld [vmem:[#allocation9 + $0xdb0] sm:$0xff]
    %v1340 = vld [vmem:[#allocation9 + $0xdb8] sm:$0xff]
    %v1341 = vld [vmem:[#allocation9 + $0xdc0] sm:$0xff]
    %v1342 = vld [vmem:[#allocation9 + $0xdc8] sm:$0xff]
    %v1343 = vld [vmem:[#allocation9 + $0xdd0] sm:$0xff]
    %v1344 = vld [vmem:[#allocation9 + $0xdd8] sm:$0xff]
    %v1345 = vld [vmem:[#allocation9 + $0xde0] sm:$0xff]
    %v1346 = vld [vmem:[#allocation9 + $0xde8] sm:$0xff]
    %v1347 = vld [vmem:[#allocation9 + $0xdf0] sm:$0xff]
    %v1348 = vld [vmem:[#allocation9 + $0xdf8] sm:$0xff]
    %v1349 = vld [vmem:[#allocation9 + $0xe00] sm:$0xff]
    %v1350 = vld [vmem:[#allocation9 + $0xe08] sm:$0xff]
    %v1351 = vld [vmem:[#allocation9 + $0xe10] sm:$0xff]
    %v1352 = vld [vmem:[#allocation9 + $0xe18] sm:$0xff]
    %v1353 = vld [vmem:[#allocation9 + $0xe20] sm:$0xff]
    %v1354 = vld [vmem:[#allocation9 + $0xe28] sm:$0xff]
    %v1355 = vld [vmem:[#allocation9 + $0xe30] sm:$0xff]
    %v1356 = vld [vmem:[#allocation9 + $0xe38] sm:$0xff]
    %v1357 = vld [vmem:[#allocation9 + $0xe40] sm:$0xff]
    %v1358 = vld [vmem:[#allocation9 + $0xe48] sm:$0xff]
    %v1359 = vld [vmem:[#allocation9 + $0xe50] sm:$0xff]
    %v1360 = vld [vmem:[#allocation9 + $0xe58] sm:$0xff]
    %v1361 = vld [vmem:[#allocation9 + $0xe60] sm:$0xff]
    %v1362 = vld [vmem:[#allocation9 + $0xe68] sm:$0xff]
    %v1363 = vld [vmem:[#allocation9 + $0xe70] sm:$0xff]
    %v1364 = vld [vmem:[#allocation9 + $0xe78] sm:$0xff]
    %v1365 = vld [vmem:[#allocation9 + $0xe80] sm:$0xff]
    %v1366 = vld [vmem:[#allocation9 + $0xe88] sm:$0xff]
    %v1367 = vld [vmem:[#allocation9 + $0xe90] sm:$0xff]
    %v1368 = vld [vmem:[#allocation9 + $0xe98] sm:$0xff]
    %v1369 = vld [vmem:[#allocation9 + $0xea0] sm:$0xff]
    %v1370 = vld [vmem:[#allocation9 + $0xea8] sm:$0xff]
    %v1371 = vld [vmem:[#allocation9 + $0xeb0] sm:$0xff]
    %v1372 = vld [vmem:[#allocation9 + $0xeb8] sm:$0xff]
    %v1373 = vld [vmem:[#allocation9 + $0xec0] sm:$0xff]
    %v1374 = vld [vmem:[#allocation9 + $0xec8] sm:$0xff]
    %v1375 = vld [vmem:[#allocation9 + $0xed0] sm:$0xff]
    %v1376 = vld [vmem:[#allocation9 + $0xed8] sm:$0xff]
    %v1377 = vld [vmem:[#allocation9 + $0xee0] sm:$0xff]
    %v1378 = vld [vmem:[#allocation9 + $0xee8] sm:$0xff]
    %v1379 = vld [vmem:[#allocation9 + $0xef0] sm:$0xff]
    %v1380 = vld [vmem:[#allocation9 + $0xef8] sm:$0xff]
    %v1381 = vld [vmem:[#allocation11] sm:$0x3]
    %v1383 = vlaneseq
    %v1384 = vshrl.u32 %v1383, 7
    %v1385 = vsub.s32 0, %v1384
    %v1386 = vrot.slane %v1381, %v1385
    %v1387 = vlaneseq
    %v1388 = vshrl.u32 %v1387, 7
    %v1389 = vsub.s32 1, %v1388
    %v1390 = vrot.slane %v1381, %v1389
    %1393 = vmatprep.subr.mxu0 %v902
    %1394 = vmatpush1.msra.mxu0 %v901
    %1395 = vmatprep.subr.mxu0 %v904
    %1396 = vmatpush1.msra.mxu0 %v903
    %1397 = vmatprep.subr.mxu0 %v906
    %1398 = vmatpush1.msra.mxu0 %v905
    %1399 = vmatprep.subr.mxu0 %v908
    %1400 = vmatpush1.msra.mxu0 %v907
    %1401 = vmatprep.subr.mxu0 %v910
    %1402 = vmatpush1.msra.mxu0 %v909
    %1403 = vmatprep.subr.mxu0 %v912
    %1404 = vmatpush1.msra.mxu0 %v911
    %1405 = vmatprep.subr.mxu0 %v914
    %1406 = vmatpush1.msra.mxu0 %v913
    %1407 = vmatprep.subr.mxu0 %v916
    %1408 = vmatpush1.msra.mxu0 %v915
    %1409 = vmatprep.subr.mxu0 %v918
    %1410 = vmatpush1.msra.mxu0 %v917
    %1411 = vmatprep.subr.mxu0 %v920
    %1412 = vmatpush1.msra.mxu0 %v919
    %1413 = vmatprep.subr.mxu0 %v922
    %1414 = vmatpush1.msra.mxu0 %v921
    %1415 = vmatprep.subr.mxu0 %v924
    %1416 = vmatpush1.msra.mxu0 %v923
    %1417 = vmatprep.subr.mxu0 %v926
    %1418 = vmatpush1.msra.mxu0 %v925
    %1419 = vmatprep.subr.mxu0 %v928
    %1420 = vmatpush1.msra.mxu0 %v927
    %1421 = vmatprep.subr.mxu0 %v930
    %1422 = vmatpush1.msra.mxu0 %v929
    %1423 = vmatprep.subr.mxu0 %v932
    %1424 = vmatpush1.msra.mxu0 %v931
    %1425 = vmatprep.subr.mxu0 %v934
    %1426 = vmatpush1.msra.mxu0 %v933
    %1427 = vmatprep.subr.mxu0 %v936
    %1428 = vmatpush1.msra.mxu0 %v935
    %1429 = vmatprep.subr.mxu0 %v938
    %1430 = vmatpush1.msra.mxu0 %v937
    %1431 = vmatprep.subr.mxu0 %v940
    %1432 = vmatpush1.msra.mxu0 %v939
    %1433 = vmatprep.subr.mxu0 %v942
    %1434 = vmatpush1.msra.mxu0 %v941
    %1435 = vmatprep.subr.mxu0 %v944
    %1436 = vmatpush1.msra.mxu0 %v943
    %1437 = vmatprep.subr.mxu0 %v946
    %1438 = vmatpush1.msra.mxu0 %v945
    %1439 = vmatprep.subr.mxu0 %v948
    %1440 = vmatpush1.msra.mxu0 %v947
    %1441 = vmatprep.subr.mxu0 %v950
    %1442 = vmatpush1.msra.mxu0 %v949
    %1443 = vmatprep.subr.mxu0 %v952
    %1444 = vmatpush1.msra.mxu0 %v951
    %1445 = vmatprep.subr.mxu0 %v954
    %1446 = vmatpush1.msra.mxu0 %v953
    %1447 = vmatprep.subr.mxu0 %v956
    %1448 = vmatpush1.msra.mxu0 %v955
    %1449 = vmatprep.subr.mxu0 %v958
    %1450 = vmatpush1.msra.mxu0 %v957
    %1451 = vmatprep.subr.mxu0 %v960
    %1452 = vmatpush1.msra.mxu0 %v959
    %1453 = vmatprep.subr.mxu0 %v962
    %1454 = vmatpush1.msra.mxu0 %v961
    %1455 = vmatprep.subr.mxu0 %v964
    %1456 = vmatpush1.msra.mxu0 %v963
    %1457 = vmatprep.mubr.f32.mxu0 %v887
    %1458 = vmatmul.mubr.f32.gmra.mrb[0].mxu0 %v886
    %v1459 = vpop.f32.mrb[0].mxu0
    %v1460 = vadd.f32 %v1386, %v1459
    %v1461 = vpop.f32.mrb[0].mxu0
    %v1462 = vadd.f32 %v1390, %v1461
    %1463 = vdwg.mxu0
    %1464 = vmatprep.subr.mxu0 %v966
    %1465 = vmatpush1.msra.mxu0 %v965
    %1466 = vmatprep.subr.mxu0 %v968
    %1467 = vmatpush1.msra.mxu0 %v967
    %1468 = vmatprep.subr.mxu0 %v970
    %1469 = vmatpush1.msra.mxu0 %v969
    %1470 = vmatprep.subr.mxu0 %v972
    %1471 = vmatpush1.msra.mxu0 %v971
    %1472 = vmatprep.subr.mxu0 %v974
    %1473 = vmatpush1.msra.mxu0 %v973
    %1474 = vmatprep.subr.mxu0 %v976
    %1475 = vmatpush1.msra.mxu0 %v975
    %1476 = vmatprep.subr.mxu0 %v978
    %1477 = vmatpush1.msra.mxu0 %v977
    %1478 = vmatprep.subr.mxu0 %v980
    %1479 = vmatpush1.msra.mxu0 %v979
    %1480 = vmatprep.subr.mxu0 %v982
    %1481 = vmatpush1.msra.mxu0 %v981
    %1482 = vmatprep.subr.mxu0 %v984
    %1483 = vmatpush1.msra.mxu0 %v983
    %1484 = vmatprep.subr.mxu0 %v986
    %1485 = vmatpush1.msra.mxu0 %v985
    %1486 = vmatprep.subr.mxu0 %v988
    %1487 = vmatpush1.msra.mxu0 %v987
    %1488 = vmatprep.subr.mxu0 %v990
    %1489 = vmatpush1.msra.mxu0 %v989
    %1490 = vmatprep.subr.mxu0 %v992
    %1491 = vmatpush1.msra.mxu0 %v991
    %1492 = vmatprep.subr.mxu0 %v994
    %1493 = vmatpush1.msra.mxu0 %v993
    %1494 = vmatprep.subr.mxu0 %v996
    %1495 = vmatpush1.msra.mxu0 %v995
    %1496 = vmatprep.subr.mxu0 %v998
    %1497 = vmatpush1.msra.mxu0 %v997
    %1498 = vmatprep.subr.mxu0 %v1000
    %1499 = vmatpush1.msra.mxu0 %v999
    %1500 = vmatprep.subr.mxu0 %v1002
    %1501 = vmatpush1.msra.mxu0 %v1001
    %1502 = vmatprep.subr.mxu0 %v1004
    %1503 = vmatpush1.msra.mxu0 %v1003
    %1504 = vmatprep.subr.mxu0 %v1006
    %1505 = vmatpush1.msra.mxu0 %v1005
    %1506 = vmatprep.subr.mxu0 %v1008
    %1507 = vmatpush1.msra.mxu0 %v1007
    %1508 = vmatprep.subr.mxu0 %v1010
    %1509 = vmatpush1.msra.mxu0 %v1009
    %1510 = vmatprep.subr.mxu0 %v1012
    %1511 = vmatpush1.msra.mxu0 %v1011
    %1512 = vmatprep.subr.mxu0 %v1014
    %1513 = vmatpush1.msra.mxu0 %v1013
    %1514 = vmatprep.subr.mxu0 %v1016
    %1515 = vmatpush1.msra.mxu0 %v1015
    %1516 = vmatprep.subr.mxu0 %v1018
    %1517 = vmatpush1.msra.mxu0 %v1017
    %1518 = vmatprep.subr.mxu0 %v1020
    %1519 = vmatpush1.msra.mxu0 %v1019
    %1520 = vmatprep.subr.mxu0 %v1022
    %1521 = vmatpush1.msra.mxu0 %v1021
    %1522 = vmatprep.subr.mxu0 %v1024
    %1523 = vmatpush1.msra.mxu0 %v1023
    %1524 = vmatprep.subr.mxu0 %v1026
    %1525 = vmatpush1.msra.mxu0 %v1025
    %1526 = vmatprep.subr.mxu0 %v1028
    %1527 = vmatpush1.msra.mxu0 %v1027
    %1528 = vmatprep.mubr.f32.mxu0 %v889
    %1529 = vmatmul.mubr.f32.gmra.mrb[0].mxu0 %v888
    %v1530 = vpop.f32.mrb[0].mxu0
    %v1531 = vadd.f32 %v1460, %v1530
    %v1532 = vpop.f32.mrb[0].mxu0
    %v1533 = vadd.f32 %v1462, %v1532
    %1534 = vdwg.mxu0
    %1535 = vmatprep.subr.mxu0 %v1030
    %1536 = vmatpush1.msra.mxu0 %v1029
    %1537 = vmatprep.subr.mxu0 %v1032
    %1538 = vmatpush1.msra.mxu0 %v1031
    %1539 = vmatprep.subr.mxu0 %v1034
    %1540 = vmatpush1.msra.mxu0 %v1033
    %1541 = vmatprep.subr.mxu0 %v1036
    %1542 = vmatpush1.msra.mxu0 %v1035
    %1543 = vmatprep.subr.mxu0 %v1038
    %1544 = vmatpush1.msra.mxu0 %v1037
    %1545 = vmatprep.subr.mxu0 %v1040
    %1546 = vmatpush1.msra.mxu0 %v1039
    %1547 = vmatprep.subr.mxu0 %v1042
    %1548 = vmatpush1.msra.mxu0 %v1041
    %1549 = vmatprep.subr.mxu0 %v1044
    %1550 = vmatpush1.msra.mxu0 %v1043
    %1551 = vmatprep.subr.mxu0 %v1046
    %1552 = vmatpush1.msra.mxu0 %v1045
    %1553 = vmatprep.subr.mxu0 %v1048
    %1554 = vmatpush1.msra.mxu0 %v1047
    %1555 = vmatprep.subr.mxu0 %v1050
    %1556 = vmatpush1.msra.mxu0 %v1049
    %1557 = vmatprep.subr.mxu0 %v1052
    %1558 = vmatpush1.msra.mxu0 %v1051
    %1559 = vmatprep.subr.mxu0 %v1054
    %1560 = vmatpush1.msra.mxu0 %v1053
    %1561 = vmatprep.subr.mxu0 %v1056
    %1562 = vmatpush1.msra.mxu0 %v1055
    %1563 = vmatprep.subr.mxu0 %v1058
    %1564 = vmatpush1.msra.mxu0 %v1057
    %1565 = vmatprep.subr.mxu0 %v1060
    %1566 = vmatpush1.msra.mxu0 %v1059
    %1567 = vmatprep.subr.mxu0 %v1062
    %1568 = vmatpush1.msra.mxu0 %v1061
    %1569 = vmatprep.subr.mxu0 %v1064
    %1570 = vmatpush1.msra.mxu0 %v1063
    %1571 = vmatprep.subr.mxu0 %v1066
    %1572 = vmatpush1.msra.mxu0 %v1065
    %1573 = vmatprep.subr.mxu0 %v1068
    %1574 = vmatpush1.msra.mxu0 %v1067
    %1575 = vmatprep.subr.mxu0 %v1070
    %1576 = vmatpush1.msra.mxu0 %v1069
    %1577 = vmatprep.subr.mxu0 %v1072
    %1578 = vmatpush1.msra.mxu0 %v1071
    %1579 = vmatprep.subr.mxu0 %v1074
    %1580 = vmatpush1.msra.mxu0 %v1073
    %1581 = vmatprep.subr.mxu0 %v1076
    %1582 = vmatpush1.msra.mxu0 %v1075
    %1583 = vmatprep.subr.mxu0 %v1078
    %1584 = vmatpush1.msra.mxu0 %v1077
    %1585 = vmatprep.subr.mxu0 %v1080
    %1586 = vmatpush1.msra.mxu0 %v1079
    %1587 = vmatprep.subr.mxu0 %v1082
    %1588 = vmatpush1.msra.mxu0 %v1081
    %1589 = vmatprep.subr.mxu0 %v1084
    %1590 = vmatpush1.msra.mxu0 %v1083
    %1591 = vmatprep.subr.mxu0 %v1086
    %1592 = vmatpush1.msra.mxu0 %v1085
    %1593 = vmatprep.subr.mxu0 %v1088
    %1594 = vmatpush1.msra.mxu0 %v1087
    %1595 = vmatprep.subr.mxu0 %v1090
    %1596 = vmatpush1.msra.mxu0 %v1089
    %1597 = vmatprep.subr.mxu0 %v1092
    %1598 = vmatpush1.msra.mxu0 %v1091
    %1599 = vmatprep.mubr.f32.mxu0 %v891
    %1600 = vmatmul.mubr.f32.gmra.mrb[0].mxu0 %v890
    %v1601 = vpop.f32.mrb[0].mxu0
    %v1602 = vadd.f32 %v1531, %v1601
    %v1603 = vpop.f32.mrb[0].mxu0
    %v1604 = vadd.f32 %v1533, %v1603
    %1605 = vdwg.mxu0
    %1606 = vmatprep.subr.mxu0 %v1094
    %1607 = vmatpush1.msra.mxu0 %v1093
    %1608 = vmatprep.subr.mxu0 %v1096
    %1609 = vmatpush1.msra.mxu0 %v1095
    %1610 = vmatprep.subr.mxu0 %v1098
    %1611 = vmatpush1.msra.mxu0 %v1097
    %1612 = vmatprep.subr.mxu0 %v1100
    %1613 = vmatpush1.msra.mxu0 %v1099
    %1614 = vmatprep.subr.mxu0 %v1102
    %1615 = vmatpush1.msra.mxu0 %v1101
    %1616 = vmatprep.subr.mxu0 %v1104
    %1617 = vmatpush1.msra.mxu0 %v1103
    %1618 = vmatprep.subr.mxu0 %v1106
    %1619 = vmatpush1.msra.mxu0 %v1105
    %1620 = vmatprep.subr.mxu0 %v1108
    %1621 = vmatpush1.msra.mxu0 %v1107
    %1622 = vmatprep.subr.mxu0 %v1110
    %1623 = vmatpush1.msra.mxu0 %v1109
    %1624 = vmatprep.subr.mxu0 %v1112
    %1625 = vmatpush1.msra.mxu0 %v1111
    %1626 = vmatprep.subr.mxu0 %v1114
    %1627 = vmatpush1.msra.mxu0 %v1113
    %1628 = vmatprep.subr.mxu0 %v1116
    %1629 = vmatpush1.msra.mxu0 %v1115
    %1630 = vmatprep.subr.mxu0 %v1118
    %1631 = vmatpush1.msra.mxu0 %v1117
    %1632 = vmatprep.subr.mxu0 %v1120
    %1633 = vmatpush1.msra.mxu0 %v1119
    %1634 = vmatprep.subr.mxu0 %v1122
    %1635 = vmatpush1.msra.mxu0 %v1121
    %1636 = vmatprep.subr.mxu0 %v1124
    %1637 = vmatpush1.msra.mxu0 %v1123
    %1638 = vmatprep.subr.mxu0 %v1126
    %1639 = vmatpush1.msra.mxu0 %v1125
    %1640 = vmatprep.subr.mxu0 %v1128
    %1641 = vmatpush1.msra.mxu0 %v1127
    %1642 = vmatprep.subr.mxu0 %v1130
    %1643 = vmatpush1.msra.mxu0 %v1129
    %1644 = vmatprep.subr.mxu0 %v1132
    %1645 = vmatpush1.msra.mxu0 %v1131
    %1646 = vmatprep.subr.mxu0 %v1134
    %1647 = vmatpush1.msra.mxu0 %v1133
    %1648 = vmatprep.subr.mxu0 %v1136
    %1649 = vmatpush1.msra.mxu0 %v1135
    %1650 = vmatprep.subr.mxu0 %v1138
    %1651 = vmatpush1.msra.mxu0 %v1137
    %1652 = vmatprep.subr.mxu0 %v1140
    %1653 = vmatpush1.msra.mxu0 %v1139
    %1654 = vmatprep.subr.mxu0 %v1142
    %1655 = vmatpush1.msra.mxu0 %v1141
    %1656 = vmatprep.subr.mxu0 %v1144
    %1657 = vmatpush1.msra.mxu0 %v1143
    %1658 = vmatprep.subr.mxu0 %v1146
    %1659 = vmatpush1.msra.mxu0 %v1145
    %1660 = vmatprep.subr.mxu0 %v1148
    %1661 = vmatpush1.msra.mxu0 %v1147
    %1662 = vmatprep.subr.mxu0 %v1150
    %1663 = vmatpush1.msra.mxu0 %v1149
    %1664 = vmatprep.subr.mxu0 %v1152
    %1665 = vmatpush1.msra.mxu0 %v1151
    %1666 = vmatprep.subr.mxu0 %v1154
    %1667 = vmatpush1.msra.mxu0 %v1153
    %1668 = vmatprep.subr.mxu0 %v1156
    %1669 = vmatpush1.msra.mxu0 %v1155
    %1670 = vmatprep.mubr.f32.mxu0 %v893
    %1671 = vmatmul.mubr.f32.gmra.mrb[0].mxu0 %v892
    %v1672 = vpop.f32.mrb[0].mxu0
    %v1673 = vadd.f32 %v1602, %v1672
    %v1674 = vpop.f32.mrb[0].mxu0
    %v1675 = vadd.f32 %v1604, %v1674
    %1676 = vdwg.mxu0
    %1677 = vmatprep.subr.mxu0 %v1158
    %1678 = vmatpush1.msra.mxu0 %v1157
    %1679 = vmatprep.subr.mxu0 %v1160
    %1680 = vmatpush1.msra.mxu0 %v1159
    %1681 = vmatprep.subr.mxu0 %v1162
    %1682 = vmatpush1.msra.mxu0 %v1161
    %1683 = vmatprep.subr.mxu0 %v1164
    %1684 = vmatpush1.msra.mxu0 %v1163
    %1685 = vmatprep.subr.mxu0 %v1166
    %1686 = vmatpush1.msra.mxu0 %v1165
    %1687 = vmatprep.subr.mxu0 %v1168
    %1688 = vmatpush1.msra.mxu0 %v1167
    %1689 = vmatprep.subr.mxu0 %v1170
    %1690 = vmatpush1.msra.mxu0 %v1169
    %1691 = vmatprep.subr.mxu0 %v1172
    %1692 = vmatpush1.msra.mxu0 %v1171
    %1693 = vmatprep.subr.mxu0 %v1174
    %1694 = vmatpush1.msra.mxu0 %v1173
    %1695 = vmatprep.subr.mxu0 %v1176
    %1696 = vmatpush1.msra.mxu0 %v1175
    %1697 = vmatprep.subr.mxu0 %v1178
    %1698 = vmatpush1.msra.mxu0 %v1177
    %1699 = vmatprep.subr.mxu0 %v1180
    %1700 = vmatpush1.msra.mxu0 %v1179
    %1701 = vmatprep.subr.mxu0 %v1182
    %1702 = vmatpush1.msra.mxu0 %v1181
    %1703 = vmatprep.subr.mxu0 %v1184
    %1704 = vmatpush1.msra.mxu0 %v1183
    %1705 = vmatprep.subr.mxu0 %v1186
    %1706 = vmatpush1.msra.mxu0 %v1185
    %1707 = vmatprep.subr.mxu0 %v1188
    %1708 = vmatpush1.msra.mxu0 %v1187
    %1709 = vmatprep.subr.mxu0 %v1190
    %1710 = vmatpush1.msra.mxu0 %v1189
    %1711 = vmatprep.subr.mxu0 %v1192
    %1712 = vmatpush1.msra.mxu0 %v1191
    %1713 = vmatprep.subr.mxu0 %v1194
    %1714 = vmatpush1.msra.mxu0 %v1193
    %1715 = vmatprep.subr.mxu0 %v1196
    %1716 = vmatpush1.msra.mxu0 %v1195
    %1717 = vmatprep.subr.mxu0 %v1198
    %1718 = vmatpush1.msra.mxu0 %v1197
    %1719 = vmatprep.subr.mxu0 %v1200
    %1720 = vmatpush1.msra.mxu0 %v1199
    %1721 = vmatprep.subr.mxu0 %v1202
    %1722 = vmatpush1.msra.mxu0 %v1201
    %1723 = vmatprep.subr.mxu0 %v1204
    %1724 = vmatpush1.msra.mxu0 %v1203
    %1725 = vmatprep.subr.mxu0 %v1206
    %1726 = vmatpush1.msra.mxu0 %v1205
    %1727 = vmatprep.subr.mxu0 %v1208
    %1728 = vmatpush1.msra.mxu0 %v1207
    %1729 = vmatprep.subr.mxu0 %v1210
    %1730 = vmatpush1.msra.mxu0 %v1209
    %1731 = vmatprep.subr.mxu0 %v1212
    %1732 = vmatpush1.msra.mxu0 %v1211
    %1733 = vmatprep.subr.mxu0 %v1214
    %1734 = vmatpush1.msra.mxu0 %v1213
    %1735 = vmatprep.subr.mxu0 %v1216
    %1736 = vmatpush1.msra.mxu0 %v1215
    %1737 = vmatprep.subr.mxu0 %v1218
    %1738 = vmatpush1.msra.mxu0 %v1217
    %1739 = vmatprep.subr.mxu0 %v1220
    %1740 = vmatpush1.msra.mxu0 %v1219
    %1741 = vmatprep.mubr.f32.mxu0 %v895
    %1742 = vmatmul.mubr.f32.gmra.mrb[0].mxu0 %v894
    %v1743 = vpop.f32.mrb[0].mxu0
    %v1744 = vadd.f32 %v1673, %v1743
    %v1745 = vpop.f32.mrb[0].mxu0
    %v1746 = vadd.f32 %v1675, %v1745
    %1747 = vdwg.mxu0
    %1748 = vmatprep.subr.mxu0 %v1222
    %1749 = vmatpush1.msra.mxu0 %v1221
    %1750 = vmatprep.subr.mxu0 %v1224
    %1751 = vmatpush1.msra.mxu0 %v1223
    %1752 = vmatprep.subr.mxu0 %v1226
    %1753 = vmatpush1.msra.mxu0 %v1225
    %1754 = vmatprep.subr.mxu0 %v1228
    %1755 = vmatpush1.msra.mxu0 %v1227
    %1756 = vmatprep.subr.mxu0 %v1230
    %1757 = vmatpush1.msra.mxu0 %v1229
    %1758 = vmatprep.subr.mxu0 %v1232
    %1759 = vmatpush1.msra.mxu0 %v1231
    %1760 = vmatprep.subr.mxu0 %v1234
    %1761 = vmatpush1.msra.mxu0 %v1233
    %1762 = vmatprep.subr.mxu0 %v1236
    %1763 = vmatpush1.msra.mxu0 %v1235
    %1764 = vmatprep.subr.mxu0 %v1238
    %1765 = vmatpush1.msra.mxu0 %v1237
    %1766 = vmatprep.subr.mxu0 %v1240
    %1767 = vmatpush1.msra.mxu0 %v1239
    %1768 = vmatprep.subr.mxu0 %v1242
    %1769 = vmatpush1.msra.mxu0 %v1241
    %1770 = vmatprep.subr.mxu0 %v1244
    %1771 = vmatpush1.msra.mxu0 %v1243
    %1772 = vmatprep.subr.mxu0 %v1246
    %1773 = vmatpush1.msra.mxu0 %v1245
    %1774 = vmatprep.subr.mxu0 %v1248
    %1775 = vmatpush1.msra.mxu0 %v1247
    %1776 = vmatprep.subr.mxu0 %v1250
    %1777 = vmatpush1.msra.mxu0 %v1249
    %1778 = vmatprep.subr.mxu0 %v1252
    %1779 = vmatpush1.msra.mxu0 %v1251
    %1780 = vmatprep.subr.mxu0 %v1254
    %1781 = vmatpush1.msra.mxu0 %v1253
    %1782 = vmatprep.subr.mxu0 %v1256
    %1783 = vmatpush1.msra.mxu0 %v1255
    %1784 = vmatprep.subr.mxu0 %v1258
    %1785 = vmatpush1.msra.mxu0 %v1257
    %1786 = vmatprep.subr.mxu0 %v1260
    %1787 = vmatpush1.msra.mxu0 %v1259
    %1788 = vmatprep.subr.mxu0 %v1262
    %1789 = vmatpush1.msra.mxu0 %v1261
    %1790 = vmatprep.subr.mxu0 %v1264
    %1791 = vmatpush1.msra.mxu0 %v1263
    %1792 = vmatprep.subr.mxu0 %v1266
    %1793 = vmatpush1.msra.mxu0 %v1265
    %1794 = vmatprep.subr.mxu0 %v1268
    %1795 = vmatpush1.msra.mxu0 %v1267
    %1796 = vmatprep.subr.mxu0 %v1270
    %1797 = vmatpush1.msra.mxu0 %v1269
    %1798 = vmatprep.subr.mxu0 %v1272
    %1799 = vmatpush1.msra.mxu0 %v1271
    %1800 = vmatprep.subr.mxu0 %v1274
    %1801 = vmatpush1.msra.mxu0 %v1273
    %1802 = vmatprep.subr.mxu0 %v1276
    %1803 = vmatpush1.msra.mxu0 %v1275
    %1804 = vmatprep.subr.mxu0 %v1278
    %1805 = vmatpush1.msra.mxu0 %v1277
    %1806 = vmatprep.subr.mxu0 %v1280
    %1807 = vmatpush1.msra.mxu0 %v1279
    %1808 = vmatprep.subr.mxu0 %v1282
    %1809 = vmatpush1.msra.mxu0 %v1281
    %1810 = vmatprep.subr.mxu0 %v1284
    %1811 = vmatpush1.msra.mxu0 %v1283
    %1812 = vmatprep.mubr.f32.mxu0 %v897
    %1813 = vmatmul.mubr.f32.gmra.mrb[0].mxu0 %v896
    %v1814 = vpop.f32.mrb[0].mxu0
    %v1815 = vadd.f32 %v1744, %v1814
    %v1816 = vpop.f32.mrb[0].mxu0
    %v1817 = vadd.f32 %v1746, %v1816
    %1818 = vdwg.mxu0
    %1819 = vmatprep.subr.mxu0 %v1286
    %1820 = vmatpush1.msra.mxu0 %v1285
    %1821 = vmatprep.subr.mxu0 %v1288
    %1822 = vmatpush1.msra.mxu0 %v1287
    %1823 = vmatprep.subr.mxu0 %v1290
    %1824 = vmatpush1.msra.mxu0 %v1289
    %1825 = vmatprep.subr.mxu0 %v1292
    %1826 = vmatpush1.msra.mxu0 %v1291
    %1827 = vmatprep.subr.mxu0 %v1294
    %1828 = vmatpush1.msra.mxu0 %v1293
    %1829 = vmatprep.subr.mxu0 %v1296
    %1830 = vmatpush1.msra.mxu0 %v1295
    %1831 = vmatprep.subr.mxu0 %v1298
    %1832 = vmatpush1.msra.mxu0 %v1297
    %1833 = vmatprep.subr.mxu0 %v1300
    %1834 = vmatpush1.msra.mxu0 %v1299
    %1835 = vmatprep.subr.mxu0 %v1302
    %1836 = vmatpush1.msra.mxu0 %v1301
    %1837 = vmatprep.subr.mxu0 %v1304
    %1838 = vmatpush1.msra.mxu0 %v1303
    %1839 = vmatprep.subr.mxu0 %v1306
    %1840 = vmatpush1.msra.mxu0 %v1305
    %1841 = vmatprep.subr.mxu0 %v1308
    %1842 = vmatpush1.msra.mxu0 %v1307
    %1843 = vmatprep.subr.mxu0 %v1310
    %1844 = vmatpush1.msra.mxu0 %v1309
    %1845 = vmatprep.subr.mxu0 %v1312
    %1846 = vmatpush1.msra.mxu0 %v1311
    %1847 = vmatprep.subr.mxu0 %v1314
    %1848 = vmatpush1.msra.mxu0 %v1313
    %1849 = vmatprep.subr.mxu0 %v1316
    %1850 = vmatpush1.msra.mxu0 %v1315
    %1851 = vmatprep.subr.mxu0 %v1318
    %1852 = vmatpush1.msra.mxu0 %v1317
    %1853 = vmatprep.subr.mxu0 %v1320
    %1854 = vmatpush1.msra.mxu0 %v1319
    %1855 = vmatprep.subr.mxu0 %v1322
    %1856 = vmatpush1.msra.mxu0 %v1321
    %1857 = vmatprep.subr.mxu0 %v1324
    %1858 = vmatpush1.msra.mxu0 %v1323
    %1859 = vmatprep.subr.mxu0 %v1326
    %1860 = vmatpush1.msra.mxu0 %v1325
    %1861 = vmatprep.subr.mxu0 %v1328
    %1862 = vmatpush1.msra.mxu0 %v1327
    %1863 = vmatprep.subr.mxu0 %v1330
    %1864 = vmatpush1.msra.mxu0 %v1329
    %1865 = vmatprep.subr.mxu0 %v1332
    %1866 = vmatpush1.msra.mxu0 %v1331
    %1867 = vmatprep.subr.mxu0 %v1334
    %1868 = vmatpush1.msra.mxu0 %v1333
    %1869 = vmatprep.subr.mxu0 %v1336
    %1870 = vmatpush1.msra.mxu0 %v1335
    %1871 = vmatprep.subr.mxu0 %v1338
    %1872 = vmatpush1.msra.mxu0 %v1337
    %1873 = vmatprep.subr.mxu0 %v1340
    %1874 = vmatpush1.msra.mxu0 %v1339
    %1875 = vmatprep.subr.mxu0 %v1342
    %1876 = vmatpush1.msra.mxu0 %v1341
    %1877 = vmatprep.subr.mxu0 %v1344
    %1878 = vmatpush1.msra.mxu0 %v1343
    %1879 = vmatprep.subr.mxu0 %v1346
    %1880 = vmatpush1.msra.mxu0 %v1345
    %1881 = vmatprep.subr.mxu0 %v1348
    %1882 = vmatpush1.msra.mxu0 %v1347
    %1883 = vmatprep.mubr.f32.mxu0 %v899
    %1884 = vmatmul.mubr.f32.gmra.mrb[0].mxu0 %v898
    %v1885 = vpop.f32.mrb[0].mxu0
    %v1886 = vadd.f32 %v1815, %v1885
    %v1887 = vpop.f32.mrb[0].mxu0
    %v1888 = vadd.f32 %v1817, %v1887
    %1889 = vdwg.mxu0
    %1890 = vmatprep.subr.mxu0 %v1350
    %1891 = vmatpush1.msra.mxu0 %v1349
    %1892 = vmatprep.subr.mxu0 %v1352
    %1893 = vmatpush1.msra.mxu0 %v1351
    %1894 = vmatprep.subr.mxu0 %v1354
    %1895 = vmatpush1.msra.mxu0 %v1353
    %1896 = vmatprep.subr.mxu0 %v1356
    %1897 = vmatpush1.msra.mxu0 %v1355
    %1898 = vmatprep.subr.mxu0 %v1358
    %1899 = vmatpush1.msra.mxu0 %v1357
    %1900 = vmatprep.subr.mxu0 %v1360
    %1901 = vmatpush1.msra.mxu0 %v1359
    %1902 = vmatprep.subr.mxu0 %v1362
    %1903 = vmatpush1.msra.mxu0 %v1361
    %1904 = vmatprep.subr.mxu0 %v1364
    %1905 = vmatpush1.msra.mxu0 %v1363
    %1906 = vmatprep.subr.mxu0 %v1366
    %1907 = vmatpush1.msra.mxu0 %v1365
    %1908 = vmatprep.subr.mxu0 %v1368
    %1909 = vmatpush1.msra.mxu0 %v1367
    %1910 = vmatprep.subr.mxu0 %v1370
    %1911 = vmatpush1.msra.mxu0 %v1369
    %1912 = vmatprep.subr.mxu0 %v1372
    %1913 = vmatpush1.msra.mxu0 %v1371
    %1914 = vmatprep.subr.mxu0 %v1374
    %1915 = vmatpush1.msra.mxu0 %v1373
    %1916 = vmatprep.subr.mxu0 %v1376
    %1917 = vmatpush1.msra.mxu0 %v1375
    %1918 = vmatprep.subr.mxu0 %v1378
    %1919 = vmatpush1.msra.mxu0 %v1377
    %1920 = vmatprep.subr.mxu0 %v1380
    %1921 = vmatpush1.msra.mxu0 %v1379
    %1922 = vmatprep.subr.mxu0 0.0
    %1923 = vmatpush1.msra.mxu0 0.0
    %1924 = vmatprep.subr.mxu0 0.0
    %1925 = vmatpush1.msra.mxu0 0.0
    %1926 = vmatprep.subr.mxu0 0.0
    %1927 = vmatpush1.msra.mxu0 0.0
    %1928 = vmatprep.subr.mxu0 0.0
    %1929 = vmatpush1.msra.mxu0 0.0
    %1930 = vmatprep.subr.mxu0 0.0
    %1931 = vmatpush1.msra.mxu0 0.0
    %1932 = vmatprep.subr.mxu0 0.0
    %1933 = vmatpush1.msra.mxu0 0.0
    %1934 = vmatprep.subr.mxu0 0.0
    %1935 = vmatpush1.msra.mxu0 0.0
    %1936 = vmatprep.subr.mxu0 0.0
    %1937 = vmatpush1.msra.mxu0 0.0
    %1938 = vmatprep.subr.mxu0 0.0
    %1939 = vmatpush1.msra.mxu0 0.0
    %1940 = vmatprep.subr.mxu0 0.0
    %1941 = vmatpush1.msra.mxu0 0.0
    %1942 = vmatprep.subr.mxu0 0.0
    %1943 = vmatpush1.msra.mxu0 0.0
    %1944 = vmatprep.subr.mxu0 0.0
    %1945 = vmatpush1.msra.mxu0 0.0
    %1946 = vmatprep.subr.mxu0 0.0
    %1947 = vmatpush1.msra.mxu0 0.0
    %1948 = vmatprep.subr.mxu0 0.0
    %1949 = vmatpush1.msra.mxu0 0.0
    %1950 = vmatprep.subr.mxu0 0.0
    %1951 = vmatpush1.msra.mxu0 0.0
    %1952 = vmatprep.subr.mxu0 0.0
    %1953 = vmatpush1.msra.mxu0 0.0
    %1954 = vmatprep.mubr.f32.mxu0 0.0
    %1955 = vmatmul.mubr.f32.gmra.mrb[0].mxu0 %v900
    %v1956 = vpop.f32.mrb[0].mxu0
    %v1957 = vadd.f32 %v1886, %v1956
    %v1958 = vpop.f32.mrb[0].mxu0
    %v1959 = vadd.f32 %v1888, %v1958
    %1960 = vdwg.mxu0
    %v1961 = vld [vmem:[#allocation12] sm:$0x3]
    %1962 = vset.pattern.permute.xlu0 47
    %1963 = vperm.xlu0 %1962, %v115
    %v1964 = vpop.permute.xlu0 %1963
    %v1967 = vlaneseq
    %v1968 = vshrl.u32 %v1967, 7
    %v1969 = vsub.s32 0, %v1968
    %v1970 = vrot.slane %v1961, %v1969
    %v1971 = vlaneseq
    %v1972 = vshrl.u32 %v1971, 7
    %v1973 = vsub.s32 1, %v1972
    %v1974 = vrot.slane %v1961, %v1973
    %v1977 = vmul.f32 %v1964, %v1970
    %v1978 = vmul.f32 %v1964, %v1974
    %v1979 = vadd.f32 %v1957, %v1977
    %v1980 = vadd.f32 %v1959, %v1978
    %v1981 = vmax.f32 %v1979, 0.0
    %v1982 = vmax.f32 %v1980, 0.0
    %v1983 = vld [vmem:[%s6] sm:$0xff]
    %v1984 = vld [vmem:[%s6 + $0x8] sm:$0xff]
    %v1985 = vld [vmem:[%s6 + $0x10] sm:$0xff]
    %v1986 = vld [vmem:[%s6 + $0x18] sm:$0xff]
    %v1987 = vld [vmem:[%s6 + $0x20] sm:$0xff]
    %v1988 = vld [vmem:[%s6 + $0x28] sm:$0xff]
    %v1989 = vld [vmem:[%s6 + $0x30] sm:$0xff]
    %v1990 = vld [vmem:[%s6 + $0x38] sm:$0xff]
    %v1991 = vld [vmem:[%s6 + $0x40] sm:$0xff]
    %v1992 = vld [vmem:[%s6 + $0x48] sm:$0xff]
    %v1993 = vld [vmem:[%s6 + $0x50] sm:$0xff]
    %v1994 = vld [vmem:[%s6 + $0x58] sm:$0xff]
    %v1995 = vld [vmem:[%s6 + $0x60] sm:$0xff]
    %v1996 = vld [vmem:[%s6 + $0x68] sm:$0xff]
    %v1997 = vld [vmem:[%s6 + $0x70] sm:$0xff]
    %v1998 = vld [vmem:[%s6 + $0x78] sm:$0xff]
    %v1999 = vld [vmem:[%s6 + $0x80] sm:$0xff]
    %v2000 = vld [vmem:[%s6 + $0x88] sm:$0xff]
    %v2001 = vld [vmem:[%s6 + $0x90] sm:$0xff]
    %v2002 = vld [vmem:[%s6 + $0x98] sm:$0xff]
    %v2003 = vld [vmem:[%s6 + $0xa0] sm:$0xff]
    %v2004 = vld [vmem:[%s6 + $0xa8] sm:$0xff]
    %v2005 = vld [vmem:[%s6 + $0xb0] sm:$0xff]
    %v2006 = vld [vmem:[%s6 + $0xb8] sm:$0xff]
    %v2007 = vld [vmem:[%s6 + $0xc0] sm:$0xff]
    %v2008 = vld [vmem:[%s6 + $0xc8] sm:$0xff]
    %v2009 = vld [vmem:[%s6 + $0xd0] sm:$0xff]
    %v2010 = vld [vmem:[%s6 + $0xd8] sm:$0xff]
    %v2011 = vld [vmem:[%s6 + $0xe0] sm:$0xff]
    %v2012 = vld [vmem:[%s6 + $0xe8] sm:$0xff]
    %v2013 = vld [vmem:[%s6 + $0xf0] sm:$0xff]
    %v2014 = vld [vmem:[%s6 + $0xf8] sm:$0xff]
    %v2015 = vld [vmem:[#allocation14] sm:$0x1]
    %v2017 = vlaneseq
    %v2018 = vshrl.u32 %v2017, 7
    %v2019 = vsub.s32 0, %v2018
    %v2020 = vrot.slane %v2015, %v2019
    %2022 = vmatprep.subr.mxu0 0.0
    %2023 = vmatpush1.msra.mxu0 %v1983
    %2024 = vmatprep.subr.mxu0 0.0
    %2025 = vmatpush1.msra.mxu0 %v1984
    %2026 = vmatprep.subr.mxu0 0.0
    %2027 = vmatpush1.msra.mxu0 %v1985
    %2028 = vmatprep.subr.mxu0 0.0
    %2029 = vmatpush1.msra.mxu0 %v1986
    %2030 = vmatprep.subr.mxu0 0.0
    %2031 = vmatpush1.msra.mxu0 %v1987
    %2032 = vmatprep.subr.mxu0 0.0
    %2033 = vmatpush1.msra.mxu0 %v1988
    %2034 = vmatprep.subr.mxu0 0.0
    %2035 = vmatpush1.msra.mxu0 %v1989
    %2036 = vmatprep.subr.mxu0 0.0
    %2037 = vmatpush1.msra.mxu0 %v1990
    %2038 = vmatprep.subr.mxu0 0.0
    %2039 = vmatpush1.msra.mxu0 %v1991
    %2040 = vmatprep.subr.mxu0 0.0
    %2041 = vmatpush1.msra.mxu0 %v1992
    %2042 = vmatprep.subr.mxu0 0.0
    %2043 = vmatpush1.msra.mxu0 %v1993
    %2044 = vmatprep.subr.mxu0 0.0
    %2045 = vmatpush1.msra.mxu0 %v1994
    %2046 = vmatprep.subr.mxu0 0.0
    %2047 = vmatpush1.msra.mxu0 %v1995
    %2048 = vmatprep.subr.mxu0 0.0
    %2049 = vmatpush1.msra.mxu0 %v1996
    %2050 = vmatprep.subr.mxu0 0.0
    %2051 = vmatpush1.msra.mxu0 %v1997
    %2052 = vmatprep.subr.mxu0 0.0
    %2053 = vmatpush1.msra.mxu0 %v1998
    %2054 = vmatprep.subr.mxu0 0.0
    %2055 = vmatpush1.msra.mxu0 %v1999
    %2056 = vmatprep.subr.mxu0 0.0
    %2057 = vmatpush1.msra.mxu0 %v2000
    %2058 = vmatprep.subr.mxu0 0.0
    %2059 = vmatpush1.msra.mxu0 %v2001
    %2060 = vmatprep.subr.mxu0 0.0
    %2061 = vmatpush1.msra.mxu0 %v2002
    %2062 = vmatprep.subr.mxu0 0.0
    %2063 = vmatpush1.msra.mxu0 %v2003
    %2064 = vmatprep.subr.mxu0 0.0
    %2065 = vmatpush1.msra.mxu0 %v2004
    %2066 = vmatprep.subr.mxu0 0.0
    %2067 = vmatpush1.msra.mxu0 %v2005
    %2068 = vmatprep.subr.mxu0 0.0
    %2069 = vmatpush1.msra.mxu0 %v2006
    %2070 = vmatprep.subr.mxu0 0.0
    %2071 = vmatpush1.msra.mxu0 %v2007
    %2072 = vmatprep.subr.mxu0 0.0
    %2073 = vmatpush1.msra.mxu0 %v2008
    %2074 = vmatprep.subr.mxu0 0.0
    %2075 = vmatpush1.msra.mxu0 %v2009
    %2076 = vmatprep.subr.mxu0 0.0
    %2077 = vmatpush1.msra.mxu0 %v2010
    %2078 = vmatprep.subr.mxu0 0.0
    %2079 = vmatpush1.msra.mxu0 %v2011
    %2080 = vmatprep.subr.mxu0 0.0
    %2081 = vmatpush1.msra.mxu0 %v2012
    %2082 = vmatprep.subr.mxu0 0.0
    %2083 = vmatpush1.msra.mxu0 %v2013
    %2084 = vmatprep.subr.mxu0 0.0
    %2085 = vmatpush1.msra.mxu0 %v2014
    %2086 = vmatprep.mubr.f32.mxu0 %v1982
    %2087 = vmatmul.mubr.f32.gmra.mrb[0].mxu0 %v1981
    %v2088 = vpop.f32.mrb[0].mxu0
    %v2089 = vadd.f32 %v2020, %v2088
    %v2090 = vpop.f32.mrb[0].mxu0
    %2091 = vdwg.mxu0
    %vm2092 = vcmask 48128
    %v2093 = vsel %vm2092, %v2089, -inf
    %2094 = vmax.xlane.f32.xlu0 %v2093
    %v2095 = vpop.xlane.xlu0 %2094
    %v2096 = vsub.f32 %v2089, %v2095
    %v2097 = vmul.f32 %v2096, 1.442695
    %v2098 = vpow.pop %v2097
    %v2099 = vsel %vm2092, %v2098, 0.0
    %2100 = vadd.xlane.f32.xlu0 %v2099
    %v2101 = vpop.xlane.xlu0 %2100
    %v2102 = vrcp.pop %v2101
    %v2103 = vmul.f32 %v2098, %v2102
    %2104 = vst.msk [vmem:[#allocation15] sm:$0xff] %vm2092, %v2103
    // Predicated region
    $region62: #{tpu_custom_call.1} parent=1 // pred_check
      _
    $region63: #{tpu_custom_call.1} parent=1 // pred_check_branch
      %2106 = sbr.rel (0) target = $region65
    $region64: #{tpu_custom_call.1} parent=1 // pred_region
      %s2108 = ssub.s32 128, 128
      %2109 = vsyncadd [#allocation5], %s2108
      %s2111 = sshll.u32 [#allocation15], 4
      %s2112 = int_to_ptr.vmem [resolvable:$true] %s2111
      %2114 = dma.vmem_to_hbm [thread:$0]  %s2112, 128, %s8, [#allocation5]
    $region65: #{tpu_custom_call.1} parent=1 // pred_fallthru
      _
    // Predicated region
    $region66: #{tpu_custom_call.1} parent=1 // pred_check
      _
    $region67: #{tpu_custom_call.1} parent=1 // pred_check_branch
      %2116 = sbr.rel (0) target = $region69
    $region68: #{tpu_custom_call.1} parent=1 // pred_region
      %2117 = dma.done [#allocation5], 128
    $region69: #{tpu_custom_call.1} parent=1 // pred_fallthru
      _
    %2118 = vsyncpa [#allocation4], 1
    %2119 = vsyncpa [#allocation7], 1
    %2120 = vsyncpa [#allocation10], 1
    %2121 = vsyncpa [#allocation13], 1
    %2122 = vsyncpa [#allocation5], 1

</llo_original>
